<compile_context>
chip_gen: v7x
topology: tpu7x:2x2x1
jax: 0.10.0
libtpu: 0.0.40
codegen_flags: <defaults>
</compile_context>

<pallas_src>
import functools
import math

import jax
import jax.numpy as jnp
from jax.experimental import pallas as pl
from jax.experimental.pallas import tpu as pltpu

EPS = 1e-6
NEG_INF = -1e9


def _layernorm_torch(x, a, b):
    """PyTorch LayerNorm from the module: mean / *unbiased* std, eps on std."""
    d = x.shape[-1]
    mean = jnp.mean(x, axis=-1, keepdims=True)
    var = jnp.sum((x - mean) ** 2, axis=-1, keepdims=True) * (1.0 / (d - 1))
    std = jnp.sqrt(var)
    return a * (x - mean) / (std + EPS) + b


def encoder_layer_kernel(x_ref, mask_ref,
                         wq_ref, bq_ref, wk_ref, bk_ref, wv_ref, bv_ref,
                         wo_ref, bo_ref, w1_ref, b1_ref, w2_ref, b2_ref,
                         ln1_a_ref, ln1_b_ref, ln2_a_ref, ln2_b_ref,
                         out_ref, xn_scr, k_scr, v_scr,
                         *, num_heads, tq, use_bf16_exp):
    qi = pl.program_id(1)
    S = x_ref.shape[1]
    D = x_ref.shape[2]
    H = num_heads
    dk = D // H
    bf16 = jnp.bfloat16

    # ---- once per batch element: LN1 over the full sequence (cached bf16) and
    #      K / V projection for the full sequence, K lane-dense as (H, dk, S). --
    @pl.when(qi == 0)
    def _():
        x_full = x_ref[0]                                          # (S, D) f32
        xn = _layernorm_torch(x_full, ln1_a_ref[0], ln1_b_ref[0])
        xn_b = xn.astype(bf16)
        xn_scr[...] = xn_b                                         # reuse for Q proj
        k = jnp.dot(xn_b, wk_ref[...],
                    preferred_element_type=jnp.float32) + bk_ref[0]
        v = jnp.dot(xn_b, wv_ref[...],
                    preferred_element_type=jnp.float32) + bv_ref[0]
        v_scr[...] = jnp.transpose(v.reshape(S, H, dk), (1, 0, 2)).astype(bf16)
        # per-head 2-D transposes -> lane-dense (H, dk, S) K scratch; unrolled
        # at trace time, amortized over all query tiles of this batch element.
        for h in range(H):
            k_scr[h] = k[:, h * dk:(h + 1) * dk].T.astype(bf16)

    # ---- sublayer 0: self-attention for this query tile ----------------------
    q_start = pl.multiple_of(qi * tq, tq)
    x_q = x_ref[0, pl.ds(q_start, tq), :]                          # (TQ, D) f32 (residual)
    xn_q = xn_scr[pl.ds(q_start, tq), :]                           # (TQ, D) bf16 (cached LN1)

    # 1/sqrt(dk) is already folded into wq / bq (see prepare_params).
    q = jnp.dot(xn_q, wq_ref[...],
                preferred_element_type=jnp.float32) + bq_ref[0]    # (TQ, D) f32
    qh = jnp.transpose(q.reshape(tq, H, dk), (1, 0, 2)).astype(bf16)   # (H, TQ, dk)

    mask = mask_ref[0]                                             # (1, S)
    bias = jnp.where(mask < 0.5, NEG_INF, 0.0)                     # additive bias

    s = jnp.einsum('hqd,hds->hqs', qh, k_scr[...],
                   preferred_element_type=jnp.float32)             # (H, TQ, S)
    s = s + bias[None, :, :]
    s = s - jnp.max(s, axis=-1, keepdims=True)

    if use_bf16_exp:                                               # v6e/v7x: bf16 EUP
        p = jnp.exp(s.astype(bf16))
        l = jnp.sum(p.astype(jnp.float32), axis=-1, keepdims=True)
        pb = p
    else:                                                          # v5e/v4: f32 EUP only
        p = jnp.exp(s)
        l = jnp.sum(p, axis=-1, keepdims=True)
        pb = p.astype(bf16)

    # deferred softmax normalization: scale the (H,TQ,dk) output, not (H,TQ,S) p
    o = jnp.einsum('hqk,hkd->hqd', pb, v_scr[...],
                   preferred_element_type=jnp.float32)             # (H, TQ, dk)
    o = o * pl.reciprocal(l, approx=True)
    o = jnp.transpose(o, (1, 0, 2)).reshape(tq, D)

    attn = jnp.dot(o.astype(bf16), wo_ref[...],
                   preferred_element_type=jnp.float32) + bo_ref[0]
    x1 = x_q + attn                                                # residual (f32)

    # ---- sublayer 1: position-wise feed-forward -------------------------------
    x1n = _layernorm_torch(x1, ln2_a_ref[0], ln2_b_ref[0])
    h1 = jnp.dot(x1n.astype(bf16), w1_ref[...],
                 preferred_element_type=jnp.float32) + b1_ref[0]
    h1 = jnp.maximum(h1, 0.0)
    ff = jnp.dot(h1.astype(bf16), w2_ref[...],
                 preferred_element_type=jnp.float32) + b2_ref[0]

    out_ref[0] = (x1 + ff).astype(out_ref.dtype)


def _device_tuning():
    """(use_bf16_exp, vmem_limit_bytes, max_query_tile) per chip generation."""
    try:
        kind = jax.devices()[0].device_kind.lower()
    except Exception:  # pragma: no cover
        kind = ""
    is_v7 = ("v7" in kind) or ("7x" in kind)
    is_v6 = "v6" in kind
    is_v5 = "v5" in kind
    use_bf16_exp = is_v6 or is_v7                     # no bf16 EUP on v5e/v4
    if is_v7:
        return use_bf16_exp, 48 * 1024 * 1024, 128    # 64 MiB physical VMEM
    if is_v6 or is_v5:
        return use_bf16_exp, 100 * 1024 * 1024, 256   # 128 MiB physical VMEM
    return use_bf16_exp, 64 * 1024 * 1024, 256


def _plan_tiles(S, max_tq):
    """Return (padded_S, query_tile). Pads long sequences to a multiple of 128."""
    if S <= max_tq:
        return S, S
    S_pad = ((S + 127) // 128) * 128
    tq = max_tq
    while S_pad % tq:
        tq //= 2
    return S_pad, tq


def _const_spec(shape):
    """BlockSpec for a never-changing operand; single-buffered when supported."""
    idx = lambda b, q: (0, 0)
    if hasattr(pl, "Buffered"):
        try:
            return pl.BlockSpec(shape, idx, pipeline_mode=pl.Buffered(1))
        except TypeError:
            pass
    return pl.BlockSpec(shape, idx)


def prepare_params(params, *, num_heads):
    """One-time param prep: bf16 weights, 1/sqrt(dk) folded into wq/bq."""
    D = params["wq"].shape[0]
    dk = D // num_heads
    scale = 1.0 / math.sqrt(dk)
    bf16 = jnp.bfloat16
    p = dict(params)
    p["wq"] = (params["wq"] * scale).astype(bf16)
    p["bq"] = (params["bq"] * scale).astype(jnp.float32)
    for name in ("wk", "wv", "wo", "w1", "w2"):
        p[name] = params[name].astype(bf16)
    return p


def encoder_layer(x, mask, params, *, num_heads):
    """params must come from prepare_params()."""
    B, S, D = x.shape
    Dff = params["w1"].shape[1]
    H = num_heads
    dk = D // H

    use_bf16_exp, vmem_limit, max_tq = _device_tuning()
    S_pad, tq = _plan_tiles(S, max_tq)
    if S_pad != S:
        x = jnp.pad(x, ((0, 0), (0, S_pad - S), (0, 0)))
        mask = jnp.pad(mask, ((0, 0), (0, 0), (0, S_pad - S)))   # padded keys masked
    qt = S_pad // tq

    x_spec = pl.BlockSpec((1, S_pad, D), lambda b, q: (b, 0, 0))
    mask_spec = pl.BlockSpec((1, 1, S_pad), lambda b, q: (b, 0, 0))
    out_spec = pl.BlockSpec((1, tq, D), lambda b, q: (b, q, 0))

    kernel = functools.partial(encoder_layer_kernel, num_heads=H, tq=tq,
                               use_bf16_exp=use_bf16_exp)

    out = pl.pallas_call(
        kernel,
        out_shape=jax.ShapeDtypeStruct((B, S_pad, D), x.dtype),
        grid=(B, qt),
        in_specs=[
            x_spec, mask_spec,
            _const_spec((D, D)), _const_spec((1, D)),       # wq, bq (pre-scaled)
            _const_spec((D, D)), _const_spec((1, D)),       # wk, bk
            _const_spec((D, D)), _const_spec((1, D)),       # wv, bv
            _const_spec((D, D)), _const_spec((1, D)),       # wo, bo
            _const_spec((D, Dff)), _const_spec((1, Dff)),   # w1, b1
            _const_spec((Dff, D)), _const_spec((1, D)),     # w2, b2
            _const_spec((1, D)), _const_spec((1, D)),       # ln1 a_2, b_2
            _const_spec((1, D)), _const_spec((1, D)),       # ln2 a_2, b_2
        ],
        out_specs=out_spec,
        scratch_shapes=[
            pltpu.VMEM((S_pad, D), jnp.bfloat16),       # cached LN1(x)
            pltpu.VMEM((H, dk, S_pad), jnp.bfloat16),   # cached K (lane-dense, pre-T)
            pltpu.VMEM((H, S_pad, dk), jnp.bfloat16),   # cached V
        ],
        compiler_params=pltpu.CompilerParams(
            dimension_semantics=("parallel", "arbitrary"),
            vmem_limit_bytes=vmem_limit,
        ),
    )(x, mask,
      params["wq"], params["bq"], params["wk"], params["bk"],
      params["wv"], params["bv"], params["wo"], params["bo"],
      params["w1"], params["b1"], params["w2"], params["b2"],
      params["ln1_a"], params["ln1_b"], params["ln2_a"], params["ln2_b"])

    if S_pad != S:
        out = out[:, :S, :]
    return out


def init_params(key, d_model, d_ff):
    ks = jax.random.split(key, 12)
    s = 0.05
    return {
        "wq": jax.random.normal(ks[0], (d_model, d_model), jnp.float32) * s,
        "bq": jax.random.normal(ks[1], (1, d_model), jnp.float32) * s,
        "wk": jax.random.normal(ks[2], (d_model, d_model), jnp.float32) * s,
        "bk": jax.random.normal(ks[3], (1, d_model), jnp.float32) * s,
        "wv": jax.random.normal(ks[4], (d_model, d_model), jnp.float32) * s,
        "bv": jax.random.normal(ks[5], (1, d_model), jnp.float32) * s,
        "wo": jax.random.normal(ks[6], (d_model, d_model), jnp.float32) * s,
        "bo": jax.random.normal(ks[7], (1, d_model), jnp.float32) * s,
        "w1": jax.random.normal(ks[8], (d_model, d_ff), jnp.float32) * s,
        "b1": jax.random.normal(ks[9], (1, d_ff), jnp.float32) * s,
        "w2": jax.random.normal(ks[10], (d_ff, d_model), jnp.float32) * s,
        "b2": jax.random.normal(ks[11], (1, d_model), jnp.float32) * s,
        # LayerNorm params match nn.Parameter(torch.ones/zeros(features))
        "ln1_a": jnp.ones((1, d_model), jnp.float32),
        "ln1_b": jnp.zeros((1, d_model), jnp.float32),
        "ln2_a": jnp.ones((1, d_model), jnp.float32),
        "ln2_b": jnp.zeros((1, d_model), jnp.float32),
    }


if __name__ == "__main__":
    B, S, D, H, DFF = 2, 8, 32, 4, 64
    key = jax.random.PRNGKey(0)
    kx, kp = jax.random.split(key)

    x = jax.random.normal(kx, (B, S, D), jnp.float32)
    # mask: 1 = attend, 0 = masked (last position of batch 1 masked out)
    mask = jnp.ones((B, 1, S), jnp.float32).at[1, 0, S - 1].set(0.0)

    params = prepare_params(init_params(kp, D, DFF), num_heads=H)

    out = encoder_layer(x, mask, params, num_heads=H)
    jax.block_until_ready(out)
    assert out.shape == (B, S, D)
    assert bool(jnp.all(jnp.isfinite(out)))
    print("KERNEL_OK")
</pallas_src>

<mosaic_0001>
module attributes {stable_mosaic.version = 11 : i64} {
  func.func @encoder_layer_kernel(%arg0: i32, %arg1: i32, %arg2: memref<1x8x32xf32, #tpu.memory_space<vmem>>, %arg3: memref<1x1x8xf32, #tpu.memory_space<vmem>>, %arg4: memref<32x32xbf16, #tpu.memory_space<vmem>>, %arg5: memref<1x32xf32, #tpu.memory_space<vmem>>, %arg6: memref<32x32xbf16, #tpu.memory_space<vmem>>, %arg7: memref<1x32xf32, #tpu.memory_space<vmem>>, %arg8: memref<32x32xbf16, #tpu.memory_space<vmem>>, %arg9: memref<1x32xf32, #tpu.memory_space<vmem>>, %arg10: memref<32x32xbf16, #tpu.memory_space<vmem>>, %arg11: memref<1x32xf32, #tpu.memory_space<vmem>>, %arg12: memref<32x64xbf16, #tpu.memory_space<vmem>>, %arg13: memref<1x64xf32, #tpu.memory_space<vmem>>, %arg14: memref<64x32xbf16, #tpu.memory_space<vmem>>, %arg15: memref<1x32xf32, #tpu.memory_space<vmem>>, %arg16: memref<1x32xf32, #tpu.memory_space<vmem>>, %arg17: memref<1x32xf32, #tpu.memory_space<vmem>>, %arg18: memref<1x32xf32, #tpu.memory_space<vmem>>, %arg19: memref<1x32xf32, #tpu.memory_space<vmem>>, %arg20: memref<1x8x32xf32, #tpu.memory_space<vmem>>, %arg21: memref<8x32xbf16, #tpu.memory_space<vmem>>, %arg22: memref<4x8x8xbf16, #tpu.memory_space<vmem>>, %arg23: memref<4x8x8xbf16, #tpu.memory_space<vmem>>) attributes {dimension_semantics = [#tpu.dimension_semantics<parallel>, #tpu.dimension_semantics<arbitrary>], iteration_bounds = array<i64: 2, 1>, scalar_prefetch = 0 : i64, scratch_operands = 3 : i64, tpu.core_type = #tpu.core_type<tc>, window_params = [{transform_indices = @transform_0, window_bounds = array<i64: 1, 8, 32>}, {transform_indices = @transform_1, window_bounds = array<i64: 1, 1, 8>}, {pipeline_mode = #tpu.pipeline_mode<synchronous>, transform_indices = @transform_2, window_bounds = array<i64: 32, 32>}, {pipeline_mode = #tpu.pipeline_mode<synchronous>, transform_indices = @transform_3, window_bounds = array<i64: 1, 32>}, {pipeline_mode = #tpu.pipeline_mode<synchronous>, transform_indices = @transform_4, window_bounds = array<i64: 32, 32>}, {pipeline_mode = #tpu.pipeline_mode<synchronous>, transform_indices = @transform_5, window_bounds = array<i64: 1, 32>}, {pipeline_mode = #tpu.pipeline_mode<synchronous>, transform_indices = @transform_6, window_bounds = array<i64: 32, 32>}, {pipeline_mode = #tpu.pipeline_mode<synchronous>, transform_indices = @transform_7, window_bounds = array<i64: 1, 32>}, {pipeline_mode = #tpu.pipeline_mode<synchronous>, transform_indices = @transform_8, window_bounds = array<i64: 32, 32>}, {pipeline_mode = #tpu.pipeline_mode<synchronous>, transform_indices = @transform_9, window_bounds = array<i64: 1, 32>}, {pipeline_mode = #tpu.pipeline_mode<synchronous>, transform_indices = @transform_10, window_bounds = array<i64: 32, 64>}, {pipeline_mode = #tpu.pipeline_mode<synchronous>, transform_indices = @transform_11, window_bounds = array<i64: 1, 64>}, {pipeline_mode = #tpu.pipeline_mode<synchronous>, transform_indices = @transform_12, window_bounds = array<i64: 64, 32>}, {pipeline_mode = #tpu.pipeline_mode<synchronous>, transform_indices = @transform_13, window_bounds = array<i64: 1, 32>}, {pipeline_mode = #tpu.pipeline_mode<synchronous>, transform_indices = @transform_14, window_bounds = array<i64: 1, 32>}, {pipeline_mode = #tpu.pipeline_mode<synchronous>, transform_indices = @transform_15, window_bounds = array<i64: 1, 32>}, {pipeline_mode = #tpu.pipeline_mode<synchronous>, transform_indices = @transform_16, window_bounds = array<i64: 1, 32>}, {pipeline_mode = #tpu.pipeline_mode<synchronous>, transform_indices = @transform_17, window_bounds = array<i64: 1, 32>}, {transform_indices = @transform_18, window_bounds = array<i64: 1, 8, 32>}]} {
    %c0_i32 = arith.constant 0 : i32
    %0 = arith.cmpi eq, %arg1, %c0_i32 : i32
    %1 = arith.extui %0 : i1 to i32
    %c0_i32_0 = arith.constant 0 : i32
    %2 = arith.cmpi ne, %1, %c0_i32_0 : i32
    scf.if %2 {
      %c0_51 = arith.constant 0 : index
      %c0_52 = arith.constant 0 : index
      %c0_53 = arith.constant 0 : index
      %106 = vector.load %arg2[%c0_51, %c0_52, %c0_53] : memref<1x8x32xf32, #tpu.memory_space<vmem>>, vector<1x8x32xf32>
      %107 = vector.shape_cast %106 : vector<1x8x32xf32> to vector<8x32xf32>
      %c0_54 = arith.constant 0 : index
      %c0_55 = arith.constant 0 : index
      %108 = vector.load %arg16[%c0_54, %c0_55] : memref<1x32xf32, #tpu.memory_space<vmem>>, vector<1x32xf32>
      %109 = vector.shape_cast %108 : vector<1x32xf32> to vector<32xf32>
      %c0_56 = arith.constant 0 : index
      %c0_57 = arith.constant 0 : index
      %110 = vector.load %arg17[%c0_56, %c0_57] : memref<1x32xf32, #tpu.memory_space<vmem>>, vector<1x32xf32>
      %111 = vector.shape_cast %110 : vector<1x32xf32> to vector<32xf32>
      %cst_58 = arith.constant dense<0.000000e+00> : vector<8xf32>
      %112 = vector.multi_reduction <add>, %107, %cst_58 [1] : vector<8x32xf32> to vector<8xf32>
      %113 = vector.shape_cast %112 : vector<8xf32> to vector<8x1xf32>
      %cst_59 = arith.constant 3.200000e+01 : f32
      %114 = vector.broadcast %cst_59 : f32 to vector<8x1xf32>
      %115 = arith.divf %113, %114 : vector<8x1xf32>
      %116 = vector.broadcast %115 : vector<8x1xf32> to vector<8x32xf32>
      %117 = arith.subf %107, %116 : vector<8x32xf32>
      %118 = arith.mulf %117, %117 : vector<8x32xf32>
      %cst_60 = arith.constant dense<0.000000e+00> : vector<8xf32>
      %119 = vector.multi_reduction <add>, %118, %cst_60 [1] : vector<8x32xf32> to vector<8xf32>
      %120 = vector.shape_cast %119 : vector<8xf32> to vector<8x1xf32>
      %cst_61 = arith.constant 0.0322580636 : f32
      %121 = vector.broadcast %cst_61 : f32 to vector<8x1xf32>
      %122 = arith.mulf %120, %121 : vector<8x1xf32>
      %123 = math.sqrt %122 : vector<8x1xf32>
      %124 = vector.broadcast %115 : vector<8x1xf32> to vector<8x32xf32>
      %125 = arith.subf %107, %124 : vector<8x32xf32>
      %126 = vector.shape_cast %109 : vector<32xf32> to vector<1x32xf32>
      %127 = vector.broadcast %126 : vector<1x32xf32> to vector<8x32xf32>
      %128 = arith.mulf %127, %125 : vector<8x32xf32>
      %cst_62 = arith.constant 9.99999997E-7 : f32
      %129 = vector.broadcast %cst_62 : f32 to vector<8x1xf32>
      %130 = arith.addf %123, %129 : vector<8x1xf32>
      %131 = vector.broadcast %130 : vector<8x1xf32> to vector<8x32xf32>
      %132 = arith.divf %128, %131 : vector<8x32xf32>
      %133 = vector.shape_cast %111 : vector<32xf32> to vector<1x32xf32>
      %134 = vector.broadcast %133 : vector<1x32xf32> to vector<8x32xf32>
      %135 = arith.addf %132, %134 : vector<8x32xf32>
      %136 = arith.truncf %135 : vector<8x32xf32> to vector<8x32xbf16>
      %c0_63 = arith.constant 0 : index
      %c0_64 = arith.constant 0 : index
      %137 = vector.load %arg21[%c0_63, %c0_64] : memref<8x32xbf16, #tpu.memory_space<vmem>>, vector<8x32xbf16>
      tpu.vector_store %arg21[%c0_63, %c0_64], %136 {strides = array<i32>} : memref<8x32xbf16, #tpu.memory_space<vmem>>, vector<8x32xbf16>,
      %c0_65 = arith.constant 0 : index
      %c0_66 = arith.constant 0 : index
      %138 = vector.load %arg6[%c0_65, %c0_66] : memref<32x32xbf16, #tpu.memory_space<vmem>>, vector<32x32xbf16>
      %cst_67 = arith.constant dense<0.000000e+00> : vector<8x32xf32>
      %139 = tpu.matmul %136, %138, %cst_67 {dimension_numbers = #tpu.dot_dimension_numbers<[1], [0], [0], [1], [0, 0, 1, 1], [], []>} : vector<8x32xbf16>, vector<32x32xbf16>, vector<8x32xf32> -> vector<8x32xf32>
      %c0_68 = arith.constant 0 : index
      %c0_69 = arith.constant 0 : index
      %140 = vector.load %arg7[%c0_68, %c0_69] : memref<1x32xf32, #tpu.memory_space<vmem>>, vector<1x32xf32>
      %141 = vector.shape_cast %140 : vector<1x32xf32> to vector<32xf32>
      %142 = vector.shape_cast %141 : vector<32xf32> to vector<1x32xf32>
      %143 = vector.broadcast %142 : vector<1x32xf32> to vector<8x32xf32>
      %144 = arith.addf %139, %143 : vector<8x32xf32>
      %c0_70 = arith.constant 0 : index
      %c0_71 = arith.constant 0 : index
      %145 = vector.load %arg8[%c0_70, %c0_71] : memref<32x32xbf16, #tpu.memory_space<vmem>>, vector<32x32xbf16>
      %cst_72 = arith.constant dense<0.000000e+00> : vector<8x32xf32>
      %146 = tpu.matmul %136, %145, %cst_72 {dimension_numbers = #tpu.dot_dimension_numbers<[1], [0], [0], [1], [0, 0, 1, 1], [], []>} : vector<8x32xbf16>, vector<32x32xbf16>, vector<8x32xf32> -> vector<8x32xf32>
      %c0_73 = arith.constant 0 : index
      %c0_74 = arith.constant 0 : index
      %147 = vector.load %arg9[%c0_73, %c0_74] : memref<1x32xf32, #tpu.memory_space<vmem>>, vector<1x32xf32>
      %148 = vector.shape_cast %147 : vector<1x32xf32> to vector<32xf32>
      %149 = vector.shape_cast %148 : vector<32xf32> to vector<1x32xf32>
      %150 = vector.broadcast %149 : vector<1x32xf32> to vector<8x32xf32>
      %151 = arith.addf %146, %150 : vector<8x32xf32>
      %152 = vector.shape_cast %151 : vector<8x32xf32> to vector<8x4x8xf32>
      %153 = tpu.transpose %152, [1, 0, 2] : vector<8x4x8xf32> -> vector<4x8x8xf32>
      %154 = arith.truncf %153 : vector<4x8x8xf32> to vector<4x8x8xbf16>
      %c0_75 = arith.constant 0 : index
      %c0_76 = arith.constant 0 : index
      %c0_77 = arith.constant 0 : index
      %155 = vector.load %arg23[%c0_75, %c0_76, %c0_77] : memref<4x8x8xbf16, #tpu.memory_space<vmem>>, vector<4x8x8xbf16>
      tpu.vector_store %arg23[%c0_75, %c0_76, %c0_77], %154 {strides = array<i32>} : memref<4x8x8xbf16, #tpu.memory_space<vmem>>, vector<4x8x8xbf16>,
      %156 = vector.extract_strided_slice %144 {offsets = [0, 0], sizes = [8, 8], strides = [1, 1]} : vector<8x32xf32> to vector<8x8xf32>
      %157 = tpu.transpose %156, [1, 0] : vector<8x8xf32> -> vector<8x8xf32>
      %158 = arith.truncf %157 : vector<8x8xf32> to vector<8x8xbf16>
      %c0_78 = arith.constant 0 : index
      %c0_79 = arith.constant 0 : index
      %c0_80 = arith.constant 0 : index
      %159 = vector.load %arg22[%c0_78, %c0_79, %c0_80] : memref<4x8x8xbf16, #tpu.memory_space<vmem>>, vector<1x8x8xbf16>
      %160 = vector.shape_cast %159 : vector<1x8x8xbf16> to vector<8x8xbf16>
      %161 = vector.shape_cast %158 : vector<8x8xbf16> to vector<1x8x8xbf16>
      tpu.vector_store %arg22[%c0_78, %c0_79, %c0_80], %161 {strides = array<i32>} : memref<4x8x8xbf16, #tpu.memory_space<vmem>>, vector<1x8x8xbf16>,
      %162 = vector.extract_strided_slice %144 {offsets = [0, 8], sizes = [8, 8], strides = [1, 1]} : vector<8x32xf32> to vector<8x8xf32>
      %163 = tpu.transpose %162, [1, 0] : vector<8x8xf32> -> vector<8x8xf32>
      %164 = arith.truncf %163 : vector<8x8xf32> to vector<8x8xbf16>
      %c1 = arith.constant 1 : index
      %c0_81 = arith.constant 0 : index
      %c0_82 = arith.constant 0 : index
      %165 = vector.load %arg22[%c1, %c0_81, %c0_82] : memref<4x8x8xbf16, #tpu.memory_space<vmem>>, vector<1x8x8xbf16>
      %166 = vector.shape_cast %165 : vector<1x8x8xbf16> to vector<8x8xbf16>
      %167 = vector.shape_cast %164 : vector<8x8xbf16> to vector<1x8x8xbf16>
      tpu.vector_store %arg22[%c1, %c0_81, %c0_82], %167 {strides = array<i32>} : memref<4x8x8xbf16, #tpu.memory_space<vmem>>, vector<1x8x8xbf16>,
      %168 = vector.extract_strided_slice %144 {offsets = [0, 16], sizes = [8, 8], strides = [1, 1]} : vector<8x32xf32> to vector<8x8xf32>
      %169 = tpu.transpose %168, [1, 0] : vector<8x8xf32> -> vector<8x8xf32>
      %170 = arith.truncf %169 : vector<8x8xf32> to vector<8x8xbf16>
      %c2 = arith.constant 2 : index
      %c0_83 = arith.constant 0 : index
      %c0_84 = arith.constant 0 : index
      %171 = vector.load %arg22[%c2, %c0_83, %c0_84] : memref<4x8x8xbf16, #tpu.memory_space<vmem>>, vector<1x8x8xbf16>
      %172 = vector.shape_cast %171 : vector<1x8x8xbf16> to vector<8x8xbf16>
      %173 = vector.shape_cast %170 : vector<8x8xbf16> to vector<1x8x8xbf16>
      tpu.vector_store %arg22[%c2, %c0_83, %c0_84], %173 {strides = array<i32>} : memref<4x8x8xbf16, #tpu.memory_space<vmem>>, vector<1x8x8xbf16>,
      %174 = vector.extract_strided_slice %144 {offsets = [0, 24], sizes = [8, 8], strides = [1, 1]} : vector<8x32xf32> to vector<8x8xf32>
      %175 = tpu.transpose %174, [1, 0] : vector<8x8xf32> -> vector<8x8xf32>
      %176 = arith.truncf %175 : vector<8x8xf32> to vector<8x8xbf16>
      %c3 = arith.constant 3 : index
      %c0_85 = arith.constant 0 : index
      %c0_86 = arith.constant 0 : index
      %177 = vector.load %arg22[%c3, %c0_85, %c0_86] : memref<4x8x8xbf16, #tpu.memory_space<vmem>>, vector<1x8x8xbf16>
      %178 = vector.shape_cast %177 : vector<1x8x8xbf16> to vector<8x8xbf16>
      %179 = vector.shape_cast %176 : vector<8x8xbf16> to vector<1x8x8xbf16>
      tpu.vector_store %arg22[%c3, %c0_85, %c0_86], %179 {strides = array<i32>} : memref<4x8x8xbf16, #tpu.memory_space<vmem>>, vector<1x8x8xbf16>,
    } else {
    }
    %c8_i32 = arith.constant 8 : i32
    %3 = arith.muli %arg1, %c8_i32 : i32
    %4 = tpu.assume_multiple %3, 8 : i32
    %c0 = arith.constant 0 : index
    %5 = arith.index_cast %4 : i32 to index
    %c0_1 = arith.constant 0 : index
    %6 = vector.load %arg2[%c0, %5, %c0_1] : memref<1x8x32xf32, #tpu.memory_space<vmem>>, vector<1x8x32xf32>
    %7 = vector.shape_cast %6 : vector<1x8x32xf32> to vector<8x32xf32>
    %8 = arith.index_cast %4 : i32 to index
    %c0_2 = arith.constant 0 : index
    %9 = vector.load %arg21[%8, %c0_2] : memref<8x32xbf16, #tpu.memory_space<vmem>>, vector<8x32xbf16>
    %c0_3 = arith.constant 0 : index
    %c0_4 = arith.constant 0 : index
    %10 = vector.load %arg4[%c0_3, %c0_4] : memref<32x32xbf16, #tpu.memory_space<vmem>>, vector<32x32xbf16>
    %cst = arith.constant dense<0.000000e+00> : vector<8x32xf32>
    %11 = tpu.matmul %9, %10, %cst {dimension_numbers = #tpu.dot_dimension_numbers<[1], [0], [0], [1], [0, 0, 1, 1], [], []>} : vector<8x32xbf16>, vector<32x32xbf16>, vector<8x32xf32> -> vector<8x32xf32>
    %c0_5 = arith.constant 0 : index
    %c0_6 = arith.constant 0 : index
    %12 = vector.load %arg5[%c0_5, %c0_6] : memref<1x32xf32, #tpu.memory_space<vmem>>, vector<1x32xf32>
    %13 = vector.shape_cast %12 : vector<1x32xf32> to vector<32xf32>
    %14 = vector.shape_cast %13 : vector<32xf32> to vector<1x32xf32>
    %15 = vector.broadcast %14 : vector<1x32xf32> to vector<8x32xf32>
    %16 = arith.addf %11, %15 : vector<8x32xf32>
    %17 = vector.shape_cast %16 : vector<8x32xf32> to vector<8x4x8xf32>
    %18 = tpu.transpose %17, [1, 0, 2] : vector<8x4x8xf32> -> vector<4x8x8xf32>
    %19 = arith.truncf %18 : vector<4x8x8xf32> to vector<4x8x8xbf16>
    %c0_7 = arith.constant 0 : index
    %c0_8 = arith.constant 0 : index
    %c0_9 = arith.constant 0 : index
    %20 = vector.load %arg3[%c0_7, %c0_8, %c0_9] : memref<1x1x8xf32, #tpu.memory_space<vmem>>, vector<1x1x8xf32>
    %21 = vector.shape_cast %20 : vector<1x1x8xf32> to vector<1x8xf32>
    %cst_10 = arith.constant 5.000000e-01 : f32
    %22 = vector.broadcast %cst_10 : f32 to vector<1x8xf32>
    %23 = arith.cmpf olt, %21, %22 : vector<1x8xf32>
    %cst_11 = arith.constant -1.000000e+09 : f32
    %cst_12 = arith.constant 0.000000e+00 : f32
    %24 = vector.broadcast %cst_11 : f32 to vector<1x8xf32>
    %25 = vector.broadcast %cst_12 : f32 to vector<1x8xf32>
    %26 = arith.select %23, %24, %25 : vector<1x8xi1>, vector<1x8xf32>
    %c0_13 = arith.constant 0 : index
    %c0_14 = arith.constant 0 : index
    %c0_15 = arith.constant 0 : index
    %27 = vector.load %arg22[%c0_13, %c0_14, %c0_15] : memref<4x8x8xbf16, #tpu.memory_space<vmem>>, vector<4x8x8xbf16>
    "tpu.trace_start"() <{level = 10 : i32, message = "hqd,hds->hqs"}> : () -> ()
    %cst_16 = arith.constant dense<0.000000e+00> : vector<4x8x8xf32>
    %28 = tpu.matmul %19, %27, %cst_16 {dimension_numbers = #tpu.dot_dimension_numbers<[2], [1], [1], [2], [0, 0, 0, 1, 1, 2], [0], [0]>} : vector<4x8x8xbf16>, vector<4x8x8xbf16>, vector<4x8x8xf32> -> vector<4x8x8xf32>
    "tpu.trace_stop"() : () -> ()
    %29 = vector.shape_cast %26 : vector<1x8xf32> to vector<1x1x8xf32>
    %30 = vector.broadcast %29 : vector<1x1x8xf32> to vector<4x8x8xf32>
    %31 = arith.addf %28, %30 : vector<4x8x8xf32>
    %cst_17 = arith.constant dense<0xFF800000> : vector<4x8xf32>
    %32 = vector.multi_reduction <maximumf>, %31, %cst_17 [2] : vector<4x8x8xf32> to vector<4x8xf32>
    %33 = vector.shape_cast %32 : vector<4x8xf32> to vector<4x8x1xf32>
    %34 = vector.broadcast %33 : vector<4x8x1xf32> to vector<4x8x8xf32>
    %35 = arith.subf %31, %34 : vector<4x8x8xf32>
    %36 = math.exp %35 : vector<4x8x8xf32>
    %cst_18 = arith.constant dense<0.000000e+00> : vector<4x8xf32>
    %37 = vector.multi_reduction <add>, %36, %cst_18 [2] : vector<4x8x8xf32> to vector<4x8xf32>
    %38 = vector.shape_cast %37 : vector<4x8xf32> to vector<4x8x1xf32>
    %39 = arith.truncf %36 : vector<4x8x8xf32> to vector<4x8x8xbf16>
    %c0_19 = arith.constant 0 : index
    %c0_20 = arith.constant 0 : index
    %c0_21 = arith.constant 0 : index
    %40 = vector.load %arg23[%c0_19, %c0_20, %c0_21] : memref<4x8x8xbf16, #tpu.memory_space<vmem>>, vector<4x8x8xbf16>
    "tpu.trace_start"() <{level = 10 : i32, message = "hqk,hkd->hqd"}> : () -> ()
    %cst_22 = arith.constant dense<0.000000e+00> : vector<4x8x8xf32>
    %41 = tpu.matmul %39, %40, %cst_22 {dimension_numbers = #tpu.dot_dimension_numbers<[2], [1], [1], [2], [0, 0, 0, 1, 1, 2], [0], [0]>} : vector<4x8x8xbf16>, vector<4x8x8xbf16>, vector<4x8x8xf32> -> vector<4x8x8xf32>
    "tpu.trace_stop"() : () -> ()
    %42 = tpu.reciprocal %38 {approx = true} : vector<4x8x1xf32> -> vector<4x8x1xf32>
    %43 = vector.broadcast %42 : vector<4x8x1xf32> to vector<4x8x8xf32>
    %44 = arith.mulf %41, %43 : vector<4x8x8xf32>
    %45 = tpu.transpose %44, [1, 0, 2] : vector<4x8x8xf32> -> vector<8x4x8xf32>
    %46 = vector.shape_cast %45 : vector<8x4x8xf32> to vector<8x32xf32>
    %47 = arith.truncf %46 : vector<8x32xf32> to vector<8x32xbf16>
    %c0_23 = arith.constant 0 : index
    %c0_24 = arith.constant 0 : index
    %48 = vector.load %arg10[%c0_23, %c0_24] : memref<32x32xbf16, #tpu.memory_space<vmem>>, vector<32x32xbf16>
    %cst_25 = arith.constant dense<0.000000e+00> : vector<8x32xf32>
    %49 = tpu.matmul %47, %48, %cst_25 {dimension_numbers = #tpu.dot_dimension_numbers<[1], [0], [0], [1], [0, 0, 1, 1], [], []>} : vector<8x32xbf16>, vector<32x32xbf16>, vector<8x32xf32> -> vector<8x32xf32>
    %c0_26 = arith.constant 0 : index
    %c0_27 = arith.constant 0 : index
    %50 = vector.load %arg11[%c0_26, %c0_27] : memref<1x32xf32, #tpu.memory_space<vmem>>, vector<1x32xf32>
    %51 = vector.shape_cast %50 : vector<1x32xf32> to vector<32xf32>
    %52 = vector.shape_cast %51 : vector<32xf32> to vector<1x32xf32>
    %53 = vector.broadcast %52 : vector<1x32xf32> to vector<8x32xf32>
    %54 = arith.addf %49, %53 : vector<8x32xf32>
    %55 = arith.addf %7, %54 : vector<8x32xf32>
    %c0_28 = arith.constant 0 : index
    %c0_29 = arith.constant 0 : index
    %56 = vector.load %arg18[%c0_28, %c0_29] : memref<1x32xf32, #tpu.memory_space<vmem>>, vector<1x32xf32>
    %57 = vector.shape_cast %56 : vector<1x32xf32> to vector<32xf32>
    %c0_30 = arith.constant 0 : index
    %c0_31 = arith.constant 0 : index
    %58 = vector.load %arg19[%c0_30, %c0_31] : memref<1x32xf32, #tpu.memory_space<vmem>>, vector<1x32xf32>
    %59 = vector.shape_cast %58 : vector<1x32xf32> to vector<32xf32>
    %cst_32 = arith.constant dense<0.000000e+00> : vector<8xf32>
    %60 = vector.multi_reduction <add>, %55, %cst_32 [1] : vector<8x32xf32> to vector<8xf32>
    %61 = vector.shape_cast %60 : vector<8xf32> to vector<8x1xf32>
    %cst_33 = arith.constant 3.200000e+01 : f32
    %62 = vector.broadcast %cst_33 : f32 to vector<8x1xf32>
    %63 = arith.divf %61, %62 : vector<8x1xf32>
    %64 = vector.broadcast %63 : vector<8x1xf32> to vector<8x32xf32>
    %65 = arith.subf %55, %64 : vector<8x32xf32>
    %66 = arith.mulf %65, %65 : vector<8x32xf32>
    %cst_34 = arith.constant dense<0.000000e+00> : vector<8xf32>
    %67 = vector.multi_reduction <add>, %66, %cst_34 [1] : vector<8x32xf32> to vector<8xf32>
    %68 = vector.shape_cast %67 : vector<8xf32> to vector<8x1xf32>
    %cst_35 = arith.constant 0.0322580636 : f32
    %69 = vector.broadcast %cst_35 : f32 to vector<8x1xf32>
    %70 = arith.mulf %68, %69 : vector<8x1xf32>
    %71 = math.sqrt %70 : vector<8x1xf32>
    %72 = vector.broadcast %63 : vector<8x1xf32> to vector<8x32xf32>
    %73 = arith.subf %55, %72 : vector<8x32xf32>
    %74 = vector.shape_cast %57 : vector<32xf32> to vector<1x32xf32>
    %75 = vector.broadcast %74 : vector<1x32xf32> to vector<8x32xf32>
    %76 = arith.mulf %75, %73 : vector<8x32xf32>
    %cst_36 = arith.constant 9.99999997E-7 : f32
    %77 = vector.broadcast %cst_36 : f32 to vector<8x1xf32>
    %78 = arith.addf %71, %77 : vector<8x1xf32>
    %79 = vector.broadcast %78 : vector<8x1xf32> to vector<8x32xf32>
    %80 = arith.divf %76, %79 : vector<8x32xf32>
    %81 = vector.shape_cast %59 : vector<32xf32> to vector<1x32xf32>
    %82 = vector.broadcast %81 : vector<1x32xf32> to vector<8x32xf32>
    %83 = arith.addf %80, %82 : vector<8x32xf32>
    %84 = arith.truncf %83 : vector<8x32xf32> to vector<8x32xbf16>
    %c0_37 = arith.constant 0 : index
    %c0_38 = arith.constant 0 : index
    %85 = vector.load %arg12[%c0_37, %c0_38] : memref<32x64xbf16, #tpu.memory_space<vmem>>, vector<32x64xbf16>
    %cst_39 = arith.constant dense<0.000000e+00> : vector<8x64xf32>
    %86 = tpu.matmul %84, %85, %cst_39 {dimension_numbers = #tpu.dot_dimension_numbers<[1], [0], [0], [1], [0, 0, 1, 1], [], []>} : vector<8x32xbf16>, vector<32x64xbf16>, vector<8x64xf32> -> vector<8x64xf32>
    %c0_40 = arith.constant 0 : index
    %c0_41 = arith.constant 0 : index
    %87 = vector.load %arg13[%c0_40, %c0_41] : memref<1x64xf32, #tpu.memory_space<vmem>>, vector<1x64xf32>
    %88 = vector.shape_cast %87 : vector<1x64xf32> to vector<64xf32>
    %89 = vector.shape_cast %88 : vector<64xf32> to vector<1x64xf32>
    %90 = vector.broadcast %89 : vector<1x64xf32> to vector<8x64xf32>
    %91 = arith.addf %86, %90 : vector<8x64xf32>
    %cst_42 = arith.constant 0.000000e+00 : f32
    %92 = vector.broadcast %cst_42 : f32 to vector<8x64xf32>
    %93 = arith.maximumf %91, %92 : vector<8x64xf32>
    %94 = arith.truncf %93 : vector<8x64xf32> to vector<8x64xbf16>
    %c0_43 = arith.constant 0 : index
    %c0_44 = arith.constant 0 : index
    %95 = vector.load %arg14[%c0_43, %c0_44] : memref<64x32xbf16, #tpu.memory_space<vmem>>, vector<64x32xbf16>
    %cst_45 = arith.constant dense<0.000000e+00> : vector<8x32xf32>
    %96 = tpu.matmul %94, %95, %cst_45 {dimension_numbers = #tpu.dot_dimension_numbers<[1], [0], [0], [1], [0, 0, 1, 1], [], []>} : vector<8x64xbf16>, vector<64x32xbf16>, vector<8x32xf32> -> vector<8x32xf32>
    %c0_46 = arith.constant 0 : index
    %c0_47 = arith.constant 0 : index
    %97 = vector.load %arg15[%c0_46, %c0_47] : memref<1x32xf32, #tpu.memory_space<vmem>>, vector<1x32xf32>
    %98 = vector.shape_cast %97 : vector<1x32xf32> to vector<32xf32>
    %99 = vector.shape_cast %98 : vector<32xf32> to vector<1x32xf32>
    %100 = vector.broadcast %99 : vector<1x32xf32> to vector<8x32xf32>
    %101 = arith.addf %96, %100 : vector<8x32xf32>
    %102 = arith.addf %55, %101 : vector<8x32xf32>
    %c0_48 = arith.constant 0 : index
    %c0_49 = arith.constant 0 : index
    %c0_50 = arith.constant 0 : index
    %103 = vector.load %arg20[%c0_48, %c0_49, %c0_50] : memref<1x8x32xf32, #tpu.memory_space<vmem>>, vector<1x8x32xf32>
    %104 = vector.shape_cast %103 : vector<1x8x32xf32> to vector<8x32xf32>
    %105 = vector.shape_cast %102 : vector<8x32xf32> to vector<1x8x32xf32>
    tpu.vector_store %arg20[%c0_48, %c0_49, %c0_50], %105 {strides = array<i32>} : memref<1x8x32xf32, #tpu.memory_space<vmem>>, vector<1x8x32xf32>,
    return
  }
  func.func @transform_0(%arg0: i32, %arg1: i32) -> (i32, i32, i32) {
    %c0_i32 = arith.constant 0 : i32
    %c0_i32_0 = arith.constant 0 : i32
    %c0_i32_1 = arith.constant 0 : i32
    return %arg0, %c0_i32, %c0_i32_0 : i32, i32, i32
  }
  func.func @transform_1(%arg0: i32, %arg1: i32) -> (i32, i32, i32) {
    %c0_i32 = arith.constant 0 : i32
    %c0_i32_0 = arith.constant 0 : i32
    %c0_i32_1 = arith.constant 0 : i32
    return %arg0, %c0_i32, %c0_i32_0 : i32, i32, i32
  }
  func.func @transform_2(%arg0: i32, %arg1: i32) -> (i32, i32) {
    %c0_i32 = arith.constant 0 : i32
    %c0_i32_0 = arith.constant 0 : i32
    %c0_i32_1 = arith.constant 0 : i32
    return %c0_i32, %c0_i32_0 : i32, i32
  }
  func.func @transform_3(%arg0: i32, %arg1: i32) -> (i32, i32) {
    %c0_i32 = arith.constant 0 : i32
    %c0_i32_0 = arith.constant 0 : i32
    %c0_i32_1 = arith.constant 0 : i32
    return %c0_i32, %c0_i32_0 : i32, i32
  }
  func.func @transform_4(%arg0: i32, %arg1: i32) -> (i32, i32) {
    %c0_i32 = arith.constant 0 : i32
    %c0_i32_0 = arith.constant 0 : i32
    %c0_i32_1 = arith.constant 0 : i32
    return %c0_i32, %c0_i32_0 : i32, i32
  }
  func.func @transform_5(%arg0: i32, %arg1: i32) -> (i32, i32) {
    %c0_i32 = arith.constant 0 : i32
    %c0_i32_0 = arith.constant 0 : i32
    %c0_i32_1 = arith.constant 0 : i32
    return %c0_i32, %c0_i32_0 : i32, i32
  }
  func.func @transform_6(%arg0: i32, %arg1: i32) -> (i32, i32) {
    %c0_i32 = arith.constant 0 : i32
    %c0_i32_0 = arith.constant 0 : i32
    %c0_i32_1 = arith.constant 0 : i32
    return %c0_i32, %c0_i32_0 : i32, i32
  }
  func.func @transform_7(%arg0: i32, %arg1: i32) -> (i32, i32) {
    %c0_i32 = arith.constant 0 : i32
    %c0_i32_0 = arith.constant 0 : i32
    %c0_i32_1 = arith.constant 0 : i32
    return %c0_i32, %c0_i32_0 : i32, i32
  }
  func.func @transform_8(%arg0: i32, %arg1: i32) -> (i32, i32) {
    %c0_i32 = arith.constant 0 : i32
    %c0_i32_0 = arith.constant 0 : i32
    %c0_i32_1 = arith.constant 0 : i32
    return %c0_i32, %c0_i32_0 : i32, i32
  }
  func.func @transform_9(%arg0: i32, %arg1: i32) -> (i32, i32) {
    %c0_i32 = arith.constant 0 : i32
    %c0_i32_0 = arith.constant 0 : i32
    %c0_i32_1 = arith.constant 0 : i32
    return %c0_i32, %c0_i32_0 : i32, i32
  }
  func.func @transform_10(%arg0: i32, %arg1: i32) -> (i32, i32) {
    %c0_i32 = arith.constant 0 : i32
    %c0_i32_0 = arith.constant 0 : i32
    %c0_i32_1 = arith.constant 0 : i32
    return %c0_i32, %c0_i32_0 : i32, i32
  }
  func.func @transform_11(%arg0: i32, %arg1: i32) -> (i32, i32) {
    %c0_i32 = arith.constant 0 : i32
    %c0_i32_0 = arith.constant 0 : i32
    %c0_i32_1 = arith.constant 0 : i32
    return %c0_i32, %c0_i32_0 : i32, i32
  }
  func.func @transform_12(%arg0: i32, %arg1: i32) -> (i32, i32) {
    %c0_i32 = arith.constant 0 : i32
    %c0_i32_0 = arith.constant 0 : i32
    %c0_i32_1 = arith.constant 0 : i32
    return %c0_i32, %c0_i32_0 : i32, i32
  }
  func.func @transform_13(%arg0: i32, %arg1: i32) -> (i32, i32) {
    %c0_i32 = arith.constant 0 : i32
    %c0_i32_0 = arith.constant 0 : i32
    %c0_i32_1 = arith.constant 0 : i32
    return %c0_i32, %c0_i32_0 : i32, i32
  }
  func.func @transform_14(%arg0: i32, %arg1: i32) -> (i32, i32) {
    %c0_i32 = arith.constant 0 : i32
    %c0_i32_0 = arith.constant 0 : i32
    %c0_i32_1 = arith.constant 0 : i32
    return %c0_i32, %c0_i32_0 : i32, i32
  }
  func.func @transform_15(%arg0: i32, %arg1: i32) -> (i32, i32) {
    %c0_i32 = arith.constant 0 : i32
    %c0_i32_0 = arith.constant 0 : i32
    %c0_i32_1 = arith.constant 0 : i32
    return %c0_i32, %c0_i32_0 : i32, i32
  }
  func.func @transform_16(%arg0: i32, %arg1: i32) -> (i32, i32) {
    %c0_i32 = arith.constant 0 : i32
    %c0_i32_0 = arith.constant 0 : i32
    %c0_i32_1 = arith.constant 0 : i32
    return %c0_i32, %c0_i32_0 : i32, i32
  }
  func.func @transform_17(%arg0: i32, %arg1: i32) -> (i32, i32) {
    %c0_i32 = arith.constant 0 : i32
    %c0_i32_0 = arith.constant 0 : i32
    %c0_i32_1 = arith.constant 0 : i32
    return %c0_i32, %c0_i32_0 : i32, i32
  }
  func.func @transform_18(%arg0: i32, %arg1: i32) -> (i32, i32, i32) {
    %c0_i32 = arith.constant 0 : i32
    %c0_i32_0 = arith.constant 0 : i32
    return %arg0, %arg1, %c0_i32 : i32, i32, i32
  }
}

</mosaic_0001>

<llo_original>
// kernel: tpu_custom_call.1
$region0: #{tpu_custom_call.1}
  #allocation0 [shape = 'u32[]', space=smem, size = 0x4, offset = 0x4, fixed_abs, tag = 'smem constant byte address 0x4 - core index']
  #allocation1 [shape = 'u32[144,128]{1,0:T(1,128)}', space=vmem, size = 0x12000, scoped, tag = 'internal scratch']
  #allocation2 [shape = 'bf16[8,32]{1,0:T(8,128)(2,1)}', space=vmem, size = 0x800, scoped, tag = 'scratch operand']
  #allocation3 [shape = 'bf16[4,8,8]{2,1,0:T(8,128)(2,1)}', space=vmem, size = 0x2000, scoped, tag = 'scratch operand']
  #allocation4 [shape = 'bf16[4,8,8]{2,1,0:T(8,128)(2,1)}', space=vmem, size = 0x2000, scoped, tag = 'scratch operand']
  %s0 = inlined_call_operand.hbm [shape: f32[2,8,32], index: 0, kind: input, shape index: {}]
  %s1 = inlined_call_operand.hbm [shape: f32[2,1,8], index: 1, kind: input, shape index: {}]
  %s2 = inlined_call_operand.hbm [shape: bf16[32,32], index: 2, kind: input, shape index: {}]
  %s3 = inlined_call_operand.hbm [shape: f32[1,32], index: 3, kind: input, shape index: {}]
  %s4 = inlined_call_operand.hbm [shape: bf16[32,32], index: 4, kind: input, shape index: {}]
  %s5 = inlined_call_operand.hbm [shape: f32[1,32], index: 5, kind: input, shape index: {}]
  %s6 = inlined_call_operand.hbm [shape: bf16[32,32], index: 6, kind: input, shape index: {}]
  %s7 = inlined_call_operand.hbm [shape: f32[1,32], index: 7, kind: input, shape index: {}]
  %s8 = inlined_call_operand.hbm [shape: bf16[32,32], index: 8, kind: input, shape index: {}]
  %s9 = inlined_call_operand.hbm [shape: f32[1,32], index: 9, kind: input, shape index: {}]
  %s10 = inlined_call_operand.hbm [shape: bf16[32,64], index: 10, kind: input, shape index: {}]
  %s11 = inlined_call_operand.hbm [shape: f32[1,64], index: 11, kind: input, shape index: {}]
  %s12 = inlined_call_operand.hbm [shape: bf16[64,32], index: 12, kind: input, shape index: {}]
  %s13 = inlined_call_operand.hbm [shape: f32[1,32], index: 13, kind: input, shape index: {}]
  %s14 = inlined_call_operand.hbm [shape: f32[1,32], index: 14, kind: input, shape index: {}]
  %s15 = inlined_call_operand.hbm [shape: f32[1,32], index: 15, kind: input, shape index: {}]
  %s16 = inlined_call_operand.hbm [shape: f32[1,32], index: 16, kind: input, shape index: {}]
  %s17 = inlined_call_operand.hbm [shape: f32[1,32], index: 17, kind: input, shape index: {}]
  %s18 = inlined_call_operand.hbm [shape: f32[2,8,32], index: 18, kind: output, shape index: {}]
  %s19 = sld [smem:[#allocation0]]
  $region181: #{tpu_custom_call.1} parent=0
    _
  %s21 = ssub.s32 1, %s19
  %s22 = scalar_select 0, %s21, %s19
  $region1: #{tpu_custom_call.1} parent=0
    #allocation5 [shape = 'u8[8192]{0}', space=vmem, size = 0x2000, scoped, tag = 'input window, operand 0']
    #allocation6 [shape = 's32[2]{0}', space=sflag, size = 0x8, scoped, tag = 'scoped memory for tpu_custom_call.1']
    #allocation7 [shape = 's32[2]{0}', space=sflag, size = 0x8, scoped, tag = 'scoped memory for tpu_custom_call.1']
    #allocation8 [shape = 'u8[1024]{0}', space=vmem, size = 0x400, scoped, tag = 'input window, operand 1']
    #allocation9 [shape = 's32[2]{0}', space=sflag, size = 0x8, scoped, tag = 'scoped memory for tpu_custom_call.1']
    #allocation10 [shape = 'u8[8192]{0}', space=vmem, size = 0x2000, scoped, tag = 'input window, operand 2, single buffered']
    #allocation11 [shape = 'u8[512]{0}', space=vmem, size = 0x400, scoped, tag = 'input window, operand 3, single buffered']
    #allocation12 [shape = 's32[1]{0}', space=sflag, size = 0x4, scoped, tag = 'scoped memory for tpu_custom_call.1']
    #allocation13 [shape = 'u8[8192]{0}', space=vmem, size = 0x2000, scoped, tag = 'input window, operand 4, single buffered']
    #allocation14 [shape = 'u8[512]{0}', space=vmem, size = 0x400, scoped, tag = 'input window, operand 5, single buffered']
    #allocation15 [shape = 's32[1]{0}', space=sflag, size = 0x4, scoped, tag = 'scoped memory for tpu_custom_call.1']
    #allocation16 [shape = 'u8[8192]{0}', space=vmem, size = 0x2000, scoped, tag = 'input window, operand 6, single buffered']
    #allocation17 [shape = 'u8[512]{0}', space=vmem, size = 0x400, scoped, tag = 'input window, operand 7, single buffered']
    #allocation18 [shape = 's32[1]{0}', space=sflag, size = 0x4, scoped, tag = 'scoped memory for tpu_custom_call.1']
    #allocation19 [shape = 'u8[8192]{0}', space=vmem, size = 0x2000, scoped, tag = 'input window, operand 8, single buffered']
    #allocation20 [shape = 'u8[512]{0}', space=vmem, size = 0x400, scoped, tag = 'input window, operand 9, single buffered']
    #allocation21 [shape = 's32[1]{0}', space=sflag, size = 0x4, scoped, tag = 'scoped memory for tpu_custom_call.1']
    #allocation22 [shape = 'u8[8192]{0}', space=vmem, size = 0x2000, scoped, tag = 'input window, operand 10, single buffered']
    #allocation23 [shape = 'u8[512]{0}', space=vmem, size = 0x400, scoped, tag = 'input window, operand 11, single buffered']
    #allocation24 [shape = 's32[1]{0}', space=sflag, size = 0x4, scoped, tag = 'scoped memory for tpu_custom_call.1']
    #allocation25 [shape = 'u8[16384]{0}', space=vmem, size = 0x4000, scoped, tag = 'input window, operand 12, single buffered']
    #allocation26 [shape = 'u8[512]{0}', space=vmem, size = 0x400, scoped, tag = 'input window, operand 13, single buffered']
    #allocation27 [shape = 's32[1]{0}', space=sflag, size = 0x4, scoped, tag = 'scoped memory for tpu_custom_call.1']
    #allocation28 [shape = 'u8[512]{0}', space=vmem, size = 0x400, scoped, tag = 'input window, operand 14, single buffered']
    #allocation29 [shape = 'u8[512]{0}', space=vmem, size = 0x400, scoped, tag = 'input window, operand 15, single buffered']
    #allocation30 [shape = 's32[1]{0}', space=sflag, size = 0x4, scoped, tag = 'scoped memory for tpu_custom_call.1']
    #allocation31 [shape = 'u8[512]{0}', space=vmem, size = 0x400, scoped, tag = 'input window, operand 16, single buffered']
    #allocation32 [shape = 'u8[512]{0}', space=vmem, size = 0x400, scoped, tag = 'input window, operand 17, single buffered']
    #allocation33 [shape = 's32[1]{0}', space=sflag, size = 0x4, scoped, tag = 'scoped memory for tpu_custom_call.1']
    #allocation34 [shape = 'u8[8192]{0}', space=vmem, size = 0x2000, scoped, tag = 'output window, operand 0']
    %23 = vsyncpa [#allocation6], 0
    %s24 = scalar_lea.sflag [#allocation6], 1
    %25 = vsyncpa %s24, 0
    %26 = vsyncpa [#allocation9], 0
    %s27 = scalar_lea.sflag [#allocation9], 1
    %28 = vsyncpa %s27, 0
    %29 = vsyncpa [#allocation12], 0
    %30 = vsyncpa [#allocation15], 0
    %31 = vsyncpa [#allocation18], 0
    %32 = vsyncpa [#allocation21], 0
    %33 = vsyncpa [#allocation24], 0
    %34 = vsyncpa [#allocation27], 0
    %35 = vsyncpa [#allocation30], 0
    %36 = vsyncpa [#allocation33], 0
    %37 = vsyncpa [#allocation7], 0
    %s38 = scalar_lea.sflag [#allocation7], 1
    %39 = vsyncpa %s38, 0
    loop: start=0, step=1, limit=4
    $region2: #{tpu_custom_call.1} parent=1 // loop_pre_header
      _
    $region3: #{tpu_custom_call.1} parent=1 // loop_header
      %s41 = sphi 0, %s45
      %p42 = scmp.ge.s32.totalorder %s41, 4
      %s48 = sphi 0, %s60
      %s49 = sphi 0, %s56
      %s50 = sphi 0, %s48
      %s51 = sphi 0, %s49
      %s52 = sphi 0, %s50
      %s53 = sphi 0, %s51
      %s63 = sphi 0, %s65
      %s66 = sphi 0, %s63
      %s67 = sphi 0, %s66
      %s83 = sphi 0, %s67
      %s89 = sphi 0, %s91
      %s92 = sphi 0, %s89
      %s93 = sphi 0, %s92
      %s109 = sphi 0, %s93
      %s113 = sphi 0, %s113
      %s115 = sphi 0, %s113
      %s116 = sphi 0, %s115
      %s130 = sphi 0, %s116
      %s134 = sphi 0, %s134
      %s136 = sphi 0, %s134
      %s137 = sphi 0, %s136
      %s151 = sphi 0, %s137
      %s155 = sphi 0, %s155
      %s157 = sphi 0, %s155
      %s158 = sphi 0, %s157
      %s172 = sphi 0, %s158
      %s176 = sphi 0, %s176
      %s178 = sphi 0, %s176
      %s179 = sphi 0, %s178
      %s193 = sphi 0, %s179
      %s197 = sphi 0, %s197
      %s199 = sphi 0, %s197
      %s200 = sphi 0, %s199
      %s214 = sphi 0, %s200
      %s218 = sphi 0, %s218
      %s220 = sphi 0, %s218
      %s221 = sphi 0, %s220
      %s235 = sphi 0, %s221
      %s239 = sphi 0, %s239
      %s241 = sphi 0, %s239
      %s242 = sphi 0, %s241
      %s256 = sphi 0, %s242
      %s260 = sphi 0, %s260
      %s262 = sphi 0, %s260
      %s263 = sphi 0, %s262
      %s277 = sphi 0, %s263
      %s281 = sphi 0, %s281
      %s283 = sphi 0, %s281
      %s284 = sphi 0, %s283
      %s298 = sphi 0, %s284
      %s302 = sphi 0, %s302
      %s304 = sphi 0, %s302
      %s305 = sphi 0, %s304
      %s319 = sphi 0, %s305
      %s323 = sphi 0, %s323
      %s325 = sphi 0, %s323
      %s326 = sphi 0, %s325
      %s340 = sphi 0, %s326
      %s344 = sphi 0, %s344
      %s346 = sphi 0, %s344
      %s347 = sphi 0, %s346
      %s361 = sphi 0, %s347
      %s365 = sphi 0, %s365
      %s367 = sphi 0, %s365
      %s368 = sphi 0, %s367
      %s382 = sphi 0, %s368
      %s386 = sphi 0, %s386
      %s388 = sphi 0, %s386
      %s389 = sphi 0, %s388
      %s403 = sphi 0, %s389
      %s407 = sphi 0, %s407
      %s409 = sphi 0, %s407
      %s410 = sphi 0, %s409
      %s424 = sphi 0, %s410
      %s428 = sphi 0, %s428
      %s430 = sphi 0, %s428
      %s431 = sphi 0, %s430
      %s445 = sphi 0, %s431
      %s453 = sphi 0, %s455
      %s456 = sphi 0, %s453
      %s457 = sphi 0, %s456
      %s473 = sphi 0, %s457
    $region4: #{tpu_custom_call.1} parent=1 // loop_header_branch
      %44 = sbr.rel (%p42) target = $region8
    $region5: #{tpu_custom_call.1} parent=1 // loop_body
      %s46 = ssub.s32 %s41, 1
      %s47 = ssub.s32 %s41, 2
      %s54 = sadd.s32 1, %s49
      %p55 = scmp.ge.s32.totalorder %s54, 1
      %s56 = scalar_select %p55, 0, %s54
      %s57 = sadd.s32 1, %s48
      %s58 = scalar_select %p55, %s57, %s48
      %p59 = scmp.ge.s32.totalorder %s58, 2
      %s60 = scalar_select %p59, 0, %s58
      %s61 = ssub.s32 %s48, %s60
      %p62 = scmp.eq.s32.totalorder %s61, 0
      %s64 = sadd.s32 %s63, 1
      %s65 = scalar_select %p62, %s63, %s64
      %p68 = pneg %p62
      %p69 = scmp.eq.s32.totalorder %s41, 1
      %p70 = por %p68, %p69
      %p71 = scmp.ne.s32.totalorder %s63, %s66
      %p72 = scmp.eq.s32.totalorder %s41, 0
      %p73 = por %p71, %p72
      %p74 = scmp.ne.s32.totalorder %s63, %s66
      %p75 = scmp.eq.s32.totalorder %s46, 1
      %p76 = por %p74, %p75
      %p77 = scmp.ne.s32.totalorder %s66, %s67
      %p78 = scmp.eq.s32.totalorder %s46, 0
      %p79 = por %p77, %p78
      %p80 = scmp.ne.s32.totalorder %s66, %s67
      %p81 = scmp.eq.s32.totalorder %s47, 1
      %p82 = por %p80, %p81
      %p84 = scmp.ne.s32.totalorder %s67, %s83
      %p85 = scmp.eq.s32.totalorder %s47, 0
      %p86 = por %p84, %p85
      %s87 = ssub.s32 %s48, %s60
      %p88 = scmp.eq.s32.totalorder %s87, 0
      %s90 = sadd.s32 %s89, 1
      %s91 = scalar_select %p88, %s89, %s90
      %p94 = pneg %p88
      %p95 = scmp.eq.s32.totalorder %s41, 1
      %p96 = por %p94, %p95
      %p97 = scmp.ne.s32.totalorder %s89, %s92
      %p98 = scmp.eq.s32.totalorder %s41, 0
      %p99 = por %p97, %p98
      %p100 = scmp.ne.s32.totalorder %s89, %s92
      %p101 = scmp.eq.s32.totalorder %s46, 1
      %p102 = por %p100, %p101
      %p103 = scmp.ne.s32.totalorder %s92, %s93
      %p104 = scmp.eq.s32.totalorder %s46, 0
      %p105 = por %p103, %p104
      %p106 = scmp.ne.s32.totalorder %s92, %s93
      %p107 = scmp.eq.s32.totalorder %s47, 1
      %p108 = por %p106, %p107
      %p110 = scmp.ne.s32.totalorder %s93, %s109
      %p111 = scmp.eq.s32.totalorder %s47, 0
      %p112 = por %p110, %p111
      %s114 = sadd.s32 %s113, 1
      %p117 = scmp.eq.s32.totalorder %s41, 1
      %p118 = scmp.ne.s32.totalorder %s113, %s115
      %p119 = scmp.eq.s32.totalorder %s41, 0
      %p120 = por %p118, %p119
      %p121 = scmp.ne.s32.totalorder %s113, %s115
      %p122 = scmp.eq.s32.totalorder %s46, 1
      %p123 = por %p121, %p122
      %p124 = scmp.ne.s32.totalorder %s115, %s116
      %p125 = scmp.eq.s32.totalorder %s46, 0
      %p126 = por %p124, %p125
      %p127 = scmp.ne.s32.totalorder %s115, %s116
      %p128 = scmp.eq.s32.totalorder %s47, 1
      %p129 = por %p127, %p128
      %p131 = scmp.ne.s32.totalorder %s116, %s130
      %p132 = scmp.eq.s32.totalorder %s47, 0
      %p133 = por %p131, %p132
      %s135 = sadd.s32 %s134, 1
      %p138 = scmp.eq.s32.totalorder %s41, 1
      %p139 = scmp.ne.s32.totalorder %s134, %s136
      %p140 = scmp.eq.s32.totalorder %s41, 0
      %p141 = por %p139, %p140
      %p142 = scmp.ne.s32.totalorder %s134, %s136
      %p143 = scmp.eq.s32.totalorder %s46, 1
      %p144 = por %p142, %p143
      %p145 = scmp.ne.s32.totalorder %s136, %s137
      %p146 = scmp.eq.s32.totalorder %s46, 0
      %p147 = por %p145, %p146
      %p148 = scmp.ne.s32.totalorder %s136, %s137
      %p149 = scmp.eq.s32.totalorder %s47, 1
      %p150 = por %p148, %p149
      %p152 = scmp.ne.s32.totalorder %s137, %s151
      %p153 = scmp.eq.s32.totalorder %s47, 0
      %p154 = por %p152, %p153
      %s156 = sadd.s32 %s155, 1
      %p159 = scmp.eq.s32.totalorder %s41, 1
      %p160 = scmp.ne.s32.totalorder %s155, %s157
      %p161 = scmp.eq.s32.totalorder %s41, 0
      %p162 = por %p160, %p161
      %p163 = scmp.ne.s32.totalorder %s155, %s157
      %p164 = scmp.eq.s32.totalorder %s46, 1
      %p165 = por %p163, %p164
      %p166 = scmp.ne.s32.totalorder %s157, %s158
      %p167 = scmp.eq.s32.totalorder %s46, 0
      %p168 = por %p166, %p167
      %p169 = scmp.ne.s32.totalorder %s157, %s158
      %p170 = scmp.eq.s32.totalorder %s47, 1
      %p171 = por %p169, %p170
      %p173 = scmp.ne.s32.totalorder %s158, %s172
      %p174 = scmp.eq.s32.totalorder %s47, 0
      %p175 = por %p173, %p174
      %s177 = sadd.s32 %s176, 1
      %p180 = scmp.eq.s32.totalorder %s41, 1
      %p181 = scmp.ne.s32.totalorder %s176, %s178
      %p182 = scmp.eq.s32.totalorder %s41, 0
      %p183 = por %p181, %p182
      %p184 = scmp.ne.s32.totalorder %s176, %s178
      %p185 = scmp.eq.s32.totalorder %s46, 1
      %p186 = por %p184, %p185
      %p187 = scmp.ne.s32.totalorder %s178, %s179
      %p188 = scmp.eq.s32.totalorder %s46, 0
      %p189 = por %p187, %p188
      %p190 = scmp.ne.s32.totalorder %s178, %s179
      %p191 = scmp.eq.s32.totalorder %s47, 1
      %p192 = por %p190, %p191
      %p194 = scmp.ne.s32.totalorder %s179, %s193
      %p195 = scmp.eq.s32.totalorder %s47, 0
      %p196 = por %p194, %p195
      %s198 = sadd.s32 %s197, 1
      %p201 = scmp.eq.s32.totalorder %s41, 1
      %p202 = scmp.ne.s32.totalorder %s197, %s199
      %p203 = scmp.eq.s32.totalorder %s41, 0
      %p204 = por %p202, %p203
      %p205 = scmp.ne.s32.totalorder %s197, %s199
      %p206 = scmp.eq.s32.totalorder %s46, 1
      %p207 = por %p205, %p206
      %p208 = scmp.ne.s32.totalorder %s199, %s200
      %p209 = scmp.eq.s32.totalorder %s46, 0
      %p210 = por %p208, %p209
      %p211 = scmp.ne.s32.totalorder %s199, %s200
      %p212 = scmp.eq.s32.totalorder %s47, 1
      %p213 = por %p211, %p212
      %p215 = scmp.ne.s32.totalorder %s200, %s214
      %p216 = scmp.eq.s32.totalorder %s47, 0
      %p217 = por %p215, %p216
      %s219 = sadd.s32 %s218, 1
      %p222 = scmp.eq.s32.totalorder %s41, 1
      %p223 = scmp.ne.s32.totalorder %s218, %s220
      %p224 = scmp.eq.s32.totalorder %s41, 0
      %p225 = por %p223, %p224
      %p226 = scmp.ne.s32.totalorder %s218, %s220
      %p227 = scmp.eq.s32.totalorder %s46, 1
      %p228 = por %p226, %p227
      %p229 = scmp.ne.s32.totalorder %s220, %s221
      %p230 = scmp.eq.s32.totalorder %s46, 0
      %p231 = por %p229, %p230
      %p232 = scmp.ne.s32.totalorder %s220, %s221
      %p233 = scmp.eq.s32.totalorder %s47, 1
      %p234 = por %p232, %p233
      %p236 = scmp.ne.s32.totalorder %s221, %s235
      %p237 = scmp.eq.s32.totalorder %s47, 0
      %p238 = por %p236, %p237
      %s240 = sadd.s32 %s239, 1
      %p243 = scmp.eq.s32.totalorder %s41, 1
      %p244 = scmp.ne.s32.totalorder %s239, %s241
      %p245 = scmp.eq.s32.totalorder %s41, 0
      %p246 = por %p244, %p245
      %p247 = scmp.ne.s32.totalorder %s239, %s241
      %p248 = scmp.eq.s32.totalorder %s46, 1
      %p249 = por %p247, %p248
      %p250 = scmp.ne.s32.totalorder %s241, %s242
      %p251 = scmp.eq.s32.totalorder %s46, 0
      %p252 = por %p250, %p251
      %p253 = scmp.ne.s32.totalorder %s241, %s242
      %p254 = scmp.eq.s32.totalorder %s47, 1
      %p255 = por %p253, %p254
      %p257 = scmp.ne.s32.totalorder %s242, %s256
      %p258 = scmp.eq.s32.totalorder %s47, 0
      %p259 = por %p257, %p258
      %s261 = sadd.s32 %s260, 1
      %p264 = scmp.eq.s32.totalorder %s41, 1
      %p265 = scmp.ne.s32.totalorder %s260, %s262
      %p266 = scmp.eq.s32.totalorder %s41, 0
      %p267 = por %p265, %p266
      %p268 = scmp.ne.s32.totalorder %s260, %s262
      %p269 = scmp.eq.s32.totalorder %s46, 1
      %p270 = por %p268, %p269
      %p271 = scmp.ne.s32.totalorder %s262, %s263
      %p272 = scmp.eq.s32.totalorder %s46, 0
      %p273 = por %p271, %p272
      %p274 = scmp.ne.s32.totalorder %s262, %s263
      %p275 = scmp.eq.s32.totalorder %s47, 1
      %p276 = por %p274, %p275
      %p278 = scmp.ne.s32.totalorder %s263, %s277
      %p279 = scmp.eq.s32.totalorder %s47, 0
      %p280 = por %p278, %p279
      %s282 = sadd.s32 %s281, 1
      %p285 = scmp.eq.s32.totalorder %s41, 1
      %p286 = scmp.ne.s32.totalorder %s281, %s283
      %p287 = scmp.eq.s32.totalorder %s41, 0
      %p288 = por %p286, %p287
      %p289 = scmp.ne.s32.totalorder %s281, %s283
      %p290 = scmp.eq.s32.totalorder %s46, 1
      %p291 = por %p289, %p290
      %p292 = scmp.ne.s32.totalorder %s283, %s284
      %p293 = scmp.eq.s32.totalorder %s46, 0
      %p294 = por %p292, %p293
      %p295 = scmp.ne.s32.totalorder %s283, %s284
      %p296 = scmp.eq.s32.totalorder %s47, 1
      %p297 = por %p295, %p296
      %p299 = scmp.ne.s32.totalorder %s284, %s298
      %p300 = scmp.eq.s32.totalorder %s47, 0
      %p301 = por %p299, %p300
      %s303 = sadd.s32 %s302, 1
      %p306 = scmp.eq.s32.totalorder %s41, 1
      %p307 = scmp.ne.s32.totalorder %s302, %s304
      %p308 = scmp.eq.s32.totalorder %s41, 0
      %p309 = por %p307, %p308
      %p310 = scmp.ne.s32.totalorder %s302, %s304
      %p311 = scmp.eq.s32.totalorder %s46, 1
      %p312 = por %p310, %p311
      %p313 = scmp.ne.s32.totalorder %s304, %s305
      %p314 = scmp.eq.s32.totalorder %s46, 0
      %p315 = por %p313, %p314
      %p316 = scmp.ne.s32.totalorder %s304, %s305
      %p317 = scmp.eq.s32.totalorder %s47, 1
      %p318 = por %p316, %p317
      %p320 = scmp.ne.s32.totalorder %s305, %s319
      %p321 = scmp.eq.s32.totalorder %s47, 0
      %p322 = por %p320, %p321
      %s324 = sadd.s32 %s323, 1
      %p327 = scmp.eq.s32.totalorder %s41, 1
      %p328 = scmp.ne.s32.totalorder %s323, %s325
      %p329 = scmp.eq.s32.totalorder %s41, 0
      %p330 = por %p328, %p329
      %p331 = scmp.ne.s32.totalorder %s323, %s325
      %p332 = scmp.eq.s32.totalorder %s46, 1
      %p333 = por %p331, %p332
      %p334 = scmp.ne.s32.totalorder %s325, %s326
      %p335 = scmp.eq.s32.totalorder %s46, 0
      %p336 = por %p334, %p335
      %p337 = scmp.ne.s32.totalorder %s325, %s326
      %p338 = scmp.eq.s32.totalorder %s47, 1
      %p339 = por %p337, %p338
      %p341 = scmp.ne.s32.totalorder %s326, %s340
      %p342 = scmp.eq.s32.totalorder %s47, 0
      %p343 = por %p341, %p342
      %s345 = sadd.s32 %s344, 1
      %p348 = scmp.eq.s32.totalorder %s41, 1
      %p349 = scmp.ne.s32.totalorder %s344, %s346
      %p350 = scmp.eq.s32.totalorder %s41, 0
      %p351 = por %p349, %p350
      %p352 = scmp.ne.s32.totalorder %s344, %s346
      %p353 = scmp.eq.s32.totalorder %s46, 1
      %p354 = por %p352, %p353
      %p355 = scmp.ne.s32.totalorder %s346, %s347
      %p356 = scmp.eq.s32.totalorder %s46, 0
      %p357 = por %p355, %p356
      %p358 = scmp.ne.s32.totalorder %s346, %s347
      %p359 = scmp.eq.s32.totalorder %s47, 1
      %p360 = por %p358, %p359
      %p362 = scmp.ne.s32.totalorder %s347, %s361
      %p363 = scmp.eq.s32.totalorder %s47, 0
      %p364 = por %p362, %p363
      %s366 = sadd.s32 %s365, 1
      %p369 = scmp.eq.s32.totalorder %s41, 1
      %p370 = scmp.ne.s32.totalorder %s365, %s367
      %p371 = scmp.eq.s32.totalorder %s41, 0
      %p372 = por %p370, %p371
      %p373 = scmp.ne.s32.totalorder %s365, %s367
      %p374 = scmp.eq.s32.totalorder %s46, 1
      %p375 = por %p373, %p374
      %p376 = scmp.ne.s32.totalorder %s367, %s368
      %p377 = scmp.eq.s32.totalorder %s46, 0
      %p378 = por %p376, %p377
      %p379 = scmp.ne.s32.totalorder %s367, %s368
      %p380 = scmp.eq.s32.totalorder %s47, 1
      %p381 = por %p379, %p380
      %p383 = scmp.ne.s32.totalorder %s368, %s382
      %p384 = scmp.eq.s32.totalorder %s47, 0
      %p385 = por %p383, %p384
      %s387 = sadd.s32 %s386, 1
      %p390 = scmp.eq.s32.totalorder %s41, 1
      %p391 = scmp.ne.s32.totalorder %s386, %s388
      %p392 = scmp.eq.s32.totalorder %s41, 0
      %p393 = por %p391, %p392
      %p394 = scmp.ne.s32.totalorder %s386, %s388
      %p395 = scmp.eq.s32.totalorder %s46, 1
      %p396 = por %p394, %p395
      %p397 = scmp.ne.s32.totalorder %s388, %s389
      %p398 = scmp.eq.s32.totalorder %s46, 0
      %p399 = por %p397, %p398
      %p400 = scmp.ne.s32.totalorder %s388, %s389
      %p401 = scmp.eq.s32.totalorder %s47, 1
      %p402 = por %p400, %p401
      %p404 = scmp.ne.s32.totalorder %s389, %s403
      %p405 = scmp.eq.s32.totalorder %s47, 0
      %p406 = por %p404, %p405
      %s408 = sadd.s32 %s407, 1
      %p411 = scmp.eq.s32.totalorder %s41, 1
      %p412 = scmp.ne.s32.totalorder %s407, %s409
      %p413 = scmp.eq.s32.totalorder %s41, 0
      %p414 = por %p412, %p413
      %p415 = scmp.ne.s32.totalorder %s407, %s409
      %p416 = scmp.eq.s32.totalorder %s46, 1
      %p417 = por %p415, %p416
      %p418 = scmp.ne.s32.totalorder %s409, %s410
      %p419 = scmp.eq.s32.totalorder %s46, 0
      %p420 = por %p418, %p419
      %p421 = scmp.ne.s32.totalorder %s409, %s410
      %p422 = scmp.eq.s32.totalorder %s47, 1
      %p423 = por %p421, %p422
      %p425 = scmp.ne.s32.totalorder %s410, %s424
      %p426 = scmp.eq.s32.totalorder %s47, 0
      %p427 = por %p425, %p426
      %s429 = sadd.s32 %s428, 1
      %p432 = scmp.eq.s32.totalorder %s41, 1
      %p433 = scmp.ne.s32.totalorder %s428, %s430
      %p434 = scmp.eq.s32.totalorder %s41, 0
      %p435 = por %p433, %p434
      %p436 = scmp.ne.s32.totalorder %s428, %s430
      %p437 = scmp.eq.s32.totalorder %s46, 1
      %p438 = por %p436, %p437
      %p439 = scmp.ne.s32.totalorder %s430, %s431
      %p440 = scmp.eq.s32.totalorder %s46, 0
      %p441 = por %p439, %p440
      %p442 = scmp.ne.s32.totalorder %s430, %s431
      %p443 = scmp.eq.s32.totalorder %s47, 1
      %p444 = por %p442, %p443
      %p446 = scmp.ne.s32.totalorder %s431, %s445
      %p447 = scmp.eq.s32.totalorder %s47, 0
      %p448 = por %p446, %p447
      %s449 = ssub.s32 %s48, %s60
      %s450 = ssub.s32 %s49, %s56
      %s451 = sor.u32 %s449, %s450
      %p452 = scmp.eq.s32.totalorder %s451, 0
      %s454 = sadd.s32 %s453, 1
      %s455 = scalar_select %p452, %s453, %s454
      %p458 = pneg %p452
      %p459 = scmp.eq.s32.totalorder %s41, 1
      %p460 = por %p458, %p459
      %p461 = scmp.ne.s32.totalorder %s453, %s456
      %p462 = scmp.eq.s32.totalorder %s41, 0
      %p463 = por %p461, %p462
      %p464 = scmp.ne.s32.totalorder %s453, %s456
      %p465 = scmp.eq.s32.totalorder %s46, 1
      %p466 = por %p464, %p465
      %p467 = scmp.ne.s32.totalorder %s456, %s457
      %p468 = scmp.eq.s32.totalorder %s46, 0
      %p469 = por %p467, %p468
      %p470 = scmp.ne.s32.totalorder %s456, %s457
      %p471 = scmp.eq.s32.totalorder %s47, 1
      %p472 = por %p470, %p471
      %p474 = scmp.ne.s32.totalorder %s457, %s473
      %p475 = scmp.eq.s32.totalorder %s47, 0
      %p476 = por %p474, %p475
      %p477 = scmp.le.s32.totalorder 1, %s41
      %p478 = scmp.lt.s32.totalorder %s41, 3
      %p479 = pnand %p477, %p478
      %p480 = pneg %p479
      // Predicated region
      $region9: #{tpu_custom_call.1} parent=5 // pred_check
        _
      $region10: #{tpu_custom_call.1} parent=5 // pred_check_branch
        %482 = sbr.rel (%p479) target = $region12
      $region11: #{tpu_custom_call.1} parent=5 // pred_region
        %s483 = ssub.s32 %s41, 1
        // Predicated region
        $region13: #{tpu_custom_call.1} parent=11 // pred_check
          %p484 = pneg %p126
        $region14: #{tpu_custom_call.1} parent=11 // pred_check_branch
          %486 = sbr.rel (%p484) target = $region16
        $region15: #{tpu_custom_call.1} parent=11 // pred_region
          %s488 = ssub.s32 256, 256
          %489 = vsyncadd [#allocation9], %s488
          %s490 = sshll.u32 [#allocation10], 4
          %s491 = int_to_ptr.vmem [resolvable:$true] %s490
          %496 = dma.hbm_to_vmem [thread:$0]  %s2, 256, %s491, [#allocation9], 64, 64, 4
        $region16: #{tpu_custom_call.1} parent=11 // pred_fallthru
          _
        // Predicated region
        $region17: #{tpu_custom_call.1} parent=11 // pred_check
          %p497 = pneg %p147
        $region18: #{tpu_custom_call.1} parent=11 // pred_check_branch
          %499 = sbr.rel (%p497) target = $region20
        $region19: #{tpu_custom_call.1} parent=11 // pred_region
          %s501 = ssub.s32 16, 16
          %502 = vsyncadd [#allocation12], %s501
          %s504 = sshll.u32 [#allocation11], 4
          %s505 = int_to_ptr.vmem [resolvable:$true] %s504
          %507 = dma.hbm_to_vmem [thread:$0]  %s3, 16, %s505, [#allocation12]
        $region20: #{tpu_custom_call.1} parent=11 // pred_fallthru
          _
        // Predicated region
        $region21: #{tpu_custom_call.1} parent=11 // pred_check
          %p508 = pneg %p168
        $region22: #{tpu_custom_call.1} parent=11 // pred_check_branch
          %510 = sbr.rel (%p508) target = $region24
        $region23: #{tpu_custom_call.1} parent=11 // pred_region
          %s512 = ssub.s32 256, 256
          %513 = vsyncadd [#allocation12], %s512
          %s514 = sshll.u32 [#allocation13], 4
          %s515 = int_to_ptr.vmem [resolvable:$true] %s514
          %520 = dma.hbm_to_vmem [thread:$0]  %s4, 256, %s515, [#allocation12], 64, 64, 4
        $region24: #{tpu_custom_call.1} parent=11 // pred_fallthru
          _
        // Predicated region
        $region25: #{tpu_custom_call.1} parent=11 // pred_check
          %p521 = pneg %p189
        $region26: #{tpu_custom_call.1} parent=11 // pred_check_branch
          %523 = sbr.rel (%p521) target = $region28
        $region27: #{tpu_custom_call.1} parent=11 // pred_region
          %s525 = ssub.s32 16, 16
          %526 = vsyncadd [#allocation15], %s525
          %s528 = sshll.u32 [#allocation14], 4
          %s529 = int_to_ptr.vmem [resolvable:$true] %s528
          %531 = dma.hbm_to_vmem [thread:$0]  %s5, 16, %s529, [#allocation15]
        $region28: #{tpu_custom_call.1} parent=11 // pred_fallthru
          _
        // Predicated region
        $region29: #{tpu_custom_call.1} parent=11 // pred_check
          %p532 = pneg %p210
        $region30: #{tpu_custom_call.1} parent=11 // pred_check_branch
          %534 = sbr.rel (%p532) target = $region32
        $region31: #{tpu_custom_call.1} parent=11 // pred_region
          %s536 = ssub.s32 256, 256
          %537 = vsyncadd [#allocation15], %s536
          %s538 = sshll.u32 [#allocation16], 4
          %s539 = int_to_ptr.vmem [resolvable:$true] %s538
          %544 = dma.hbm_to_vmem [thread:$0]  %s6, 256, %s539, [#allocation15], 64, 64, 4
        $region32: #{tpu_custom_call.1} parent=11 // pred_fallthru
          _
        // Predicated region
        $region33: #{tpu_custom_call.1} parent=11 // pred_check
          %p545 = pneg %p231
        $region34: #{tpu_custom_call.1} parent=11 // pred_check_branch
          %547 = sbr.rel (%p545) target = $region36
        $region35: #{tpu_custom_call.1} parent=11 // pred_region
          %s549 = ssub.s32 16, 16
          %550 = vsyncadd [#allocation18], %s549
          %s552 = sshll.u32 [#allocation17], 4
          %s553 = int_to_ptr.vmem [resolvable:$true] %s552
          %555 = dma.hbm_to_vmem [thread:$0]  %s7, 16, %s553, [#allocation18]
        $region36: #{tpu_custom_call.1} parent=11 // pred_fallthru
          _
        // Predicated region
        $region37: #{tpu_custom_call.1} parent=11 // pred_check
          %p556 = pneg %p252
        $region38: #{tpu_custom_call.1} parent=11 // pred_check_branch
          %558 = sbr.rel (%p556) target = $region40
        $region39: #{tpu_custom_call.1} parent=11 // pred_region
          %s560 = ssub.s32 256, 256
          %561 = vsyncadd [#allocation18], %s560
          %s562 = sshll.u32 [#allocation19], 4
          %s563 = int_to_ptr.vmem [resolvable:$true] %s562
          %568 = dma.hbm_to_vmem [thread:$0]  %s8, 256, %s563, [#allocation18], 64, 64, 4
        $region40: #{tpu_custom_call.1} parent=11 // pred_fallthru
          _
        // Predicated region
        $region41: #{tpu_custom_call.1} parent=11 // pred_check
          %p569 = pneg %p273
        $region42: #{tpu_custom_call.1} parent=11 // pred_check_branch
          %571 = sbr.rel (%p569) target = $region44
        $region43: #{tpu_custom_call.1} parent=11 // pred_region
          %s573 = ssub.s32 16, 16
          %574 = vsyncadd [#allocation21], %s573
          %s576 = sshll.u32 [#allocation20], 4
          %s577 = int_to_ptr.vmem [resolvable:$true] %s576
          %579 = dma.hbm_to_vmem [thread:$0]  %s9, 16, %s577, [#allocation21]
        $region44: #{tpu_custom_call.1} parent=11 // pred_fallthru
          _
        // Predicated region
        $region45: #{tpu_custom_call.1} parent=11 // pred_check
          %p580 = pneg %p294
        $region46: #{tpu_custom_call.1} parent=11 // pred_check_branch
          %582 = sbr.rel (%p580) target = $region48
        $region47: #{tpu_custom_call.1} parent=11 // pred_region
          %s584 = ssub.s32 256, 256
          %585 = vsyncadd [#allocation21], %s584
          %s586 = sshll.u32 [#allocation22], 4
          %s587 = int_to_ptr.vmem [resolvable:$true] %s586
          %592 = dma.hbm_to_vmem [thread:$0]  %s10, 256, %s587, [#allocation21], 64, 64, 4
        $region48: #{tpu_custom_call.1} parent=11 // pred_fallthru
          _
        // Predicated region
        $region49: #{tpu_custom_call.1} parent=11 // pred_check
          %p593 = pneg %p315
        $region50: #{tpu_custom_call.1} parent=11 // pred_check_branch
          %595 = sbr.rel (%p593) target = $region52
        $region51: #{tpu_custom_call.1} parent=11 // pred_region
          %s597 = ssub.s32 16, 16
          %598 = vsyncadd [#allocation24], %s597
          %s600 = sshll.u32 [#allocation23], 4
          %s601 = int_to_ptr.vmem [resolvable:$true] %s600
          %603 = dma.hbm_to_vmem [thread:$0]  %s11, 16, %s601, [#allocation24]
        $region52: #{tpu_custom_call.1} parent=11 // pred_fallthru
          _
        // Predicated region
        $region53: #{tpu_custom_call.1} parent=11 // pred_check
          %p604 = pneg %p336
        $region54: #{tpu_custom_call.1} parent=11 // pred_check_branch
          %606 = sbr.rel (%p604) target = $region56
        $region55: #{tpu_custom_call.1} parent=11 // pred_region
          %s608 = ssub.s32 512, 512
          %609 = vsyncadd [#allocation24], %s608
          %s610 = sshll.u32 [#allocation25], 4
          %s611 = int_to_ptr.vmem [resolvable:$true] %s610
          %616 = dma.hbm_to_vmem [thread:$0]  %s12, 512, %s611, [#allocation24], 64, 64, 4
        $region56: #{tpu_custom_call.1} parent=11 // pred_fallthru
          _
        // Predicated region
        $region57: #{tpu_custom_call.1} parent=11 // pred_check
          %p617 = pneg %p357
        $region58: #{tpu_custom_call.1} parent=11 // pred_check_branch
          %619 = sbr.rel (%p617) target = $region60
        $region59: #{tpu_custom_call.1} parent=11 // pred_region
          %s621 = ssub.s32 16, 16
          %622 = vsyncadd [#allocation27], %s621
          %s624 = sshll.u32 [#allocation26], 4
          %s625 = int_to_ptr.vmem [resolvable:$true] %s624
          %627 = dma.hbm_to_vmem [thread:$0]  %s13, 16, %s625, [#allocation27]
        $region60: #{tpu_custom_call.1} parent=11 // pred_fallthru
          _
        // Predicated region
        $region61: #{tpu_custom_call.1} parent=11 // pred_check
          %p628 = pneg %p378
        $region62: #{tpu_custom_call.1} parent=11 // pred_check_branch
          %630 = sbr.rel (%p628) target = $region64
        $region63: #{tpu_custom_call.1} parent=11 // pred_region
          %s632 = ssub.s32 16, 16
          %633 = vsyncadd [#allocation27], %s632
          %s635 = sshll.u32 [#allocation28], 4
          %s636 = int_to_ptr.vmem [resolvable:$true] %s635
          %638 = dma.hbm_to_vmem [thread:$0]  %s14, 16, %s636, [#allocation27]
        $region64: #{tpu_custom_call.1} parent=11 // pred_fallthru
          _
        // Predicated region
        $region65: #{tpu_custom_call.1} parent=11 // pred_check
          %p639 = pneg %p399
        $region66: #{tpu_custom_call.1} parent=11 // pred_check_branch
          %641 = sbr.rel (%p639) target = $region68
        $region67: #{tpu_custom_call.1} parent=11 // pred_region
          %s643 = ssub.s32 16, 16
          %644 = vsyncadd [#allocation30], %s643
          %s646 = sshll.u32 [#allocation29], 4
          %s647 = int_to_ptr.vmem [resolvable:$true] %s646
          %649 = dma.hbm_to_vmem [thread:$0]  %s15, 16, %s647, [#allocation30]
        $region68: #{tpu_custom_call.1} parent=11 // pred_fallthru
          _
        // Predicated region
        $region69: #{tpu_custom_call.1} parent=11 // pred_check
          %p650 = pneg %p420
        $region70: #{tpu_custom_call.1} parent=11 // pred_check_branch
          %652 = sbr.rel (%p650) target = $region72
        $region71: #{tpu_custom_call.1} parent=11 // pred_region
          %s654 = ssub.s32 16, 16
          %655 = vsyncadd [#allocation30], %s654
          %s657 = sshll.u32 [#allocation31], 4
          %s658 = int_to_ptr.vmem [resolvable:$true] %s657
          %660 = dma.hbm_to_vmem [thread:$0]  %s16, 16, %s658, [#allocation30]
        $region72: #{tpu_custom_call.1} parent=11 // pred_fallthru
          _
        // Predicated region
        $region73: #{tpu_custom_call.1} parent=11 // pred_check
          %p661 = pneg %p441
        $region74: #{tpu_custom_call.1} parent=11 // pred_check_branch
          %663 = sbr.rel (%p661) target = $region76
        $region75: #{tpu_custom_call.1} parent=11 // pred_region
          %s665 = ssub.s32 16, 16
          %666 = vsyncadd [#allocation33], %s665
          %s668 = sshll.u32 [#allocation32], 4
          %s669 = int_to_ptr.vmem [resolvable:$true] %s668
          %671 = dma.hbm_to_vmem [thread:$0]  %s17, 16, %s669, [#allocation33]
        $region76: #{tpu_custom_call.1} parent=11 // pred_fallthru
          _
      $region12: #{tpu_custom_call.1} parent=5 // pred_fallthru
        _
      %p672 = scmp.lt.s32.totalorder %s41, 2
      // Predicated region
      $region77: #{tpu_custom_call.1} parent=5 // pred_check
        %p673 = pneg %p672
      $region78: #{tpu_custom_call.1} parent=5 // pred_check_branch
        %675 = sbr.rel (%p673) target = $region80
      $region79: #{tpu_custom_call.1} parent=5 // pred_region
        // Predicated region
        $region81: #{tpu_custom_call.1} parent=79 // pred_check
          %p676 = pneg %p73
        $region82: #{tpu_custom_call.1} parent=79 // pred_check_branch
          %678 = sbr.rel (%p676) target = $region84
        $region83: #{tpu_custom_call.1} parent=79 // pred_region
          %s679 = sand.u32 %s63, 1
          %s680 = scalar_lea.sflag [#allocation6], %s679
          %s681 = sand.u32 %s63, 1
          %s682 = smul.addr %s681, 8
          %s683 = scalar_lea.vmem [#allocation5], %s682
          %s685 = ssub.s32 128, 128
          %686 = vsyncadd %s680, %s685
          %s687 = smul.addr %s48, 128
          %s688 = scalar_lea.hbm %s0, %s687
          %s690 = sshll.u32 %s683, 4
          %s691 = int_to_ptr.vmem [resolvable:$true] %s690
          %693 = dma.hbm_to_vmem [thread:$0]  %s688, 128, %s691, %s680
        $region84: #{tpu_custom_call.1} parent=79 // pred_fallthru
          _
        // Predicated region
        $region85: #{tpu_custom_call.1} parent=79 // pred_check
          %p694 = pneg %p99
        $region86: #{tpu_custom_call.1} parent=79 // pred_check_branch
          %696 = sbr.rel (%p694) target = $region88
        $region87: #{tpu_custom_call.1} parent=79 // pred_region
          %s697 = sand.u32 %s41, 1
          %s698 = scalar_lea.sflag [#allocation9], %s697
          %s699 = sand.u32 %s89, 1
          %s700 = scalar_lea.vmem [#allocation8], %s699
          %s702 = ssub.s32 16, 16
          %703 = vsyncadd %s698, %s702
          %s704 = smul.addr %s48, 16
          %s705 = scalar_lea.hbm %s1, %s704
          %s707 = sshll.u32 %s700, 4
          %s708 = int_to_ptr.vmem [resolvable:$true] %s707
          %710 = dma.hbm_to_vmem [thread:$0]  %s705, 16, %s708, %s698
        $region88: #{tpu_custom_call.1} parent=79 // pred_fallthru
          _
      $region80: #{tpu_custom_call.1} parent=5 // pred_fallthru
        _
      %p711 = scmp.le.s32.totalorder 1, %s41
      %p712 = scmp.lt.s32.totalorder %s41, 3
      %p713 = pnand %p711, %p712
      %p714 = pneg %p713
      // Predicated region
      $region89: #{tpu_custom_call.1} parent=5 // pred_check
        _
      $region90: #{tpu_custom_call.1} parent=5 // pred_check_branch
        %716 = sbr.rel (%p713) target = $region92
      $region91: #{tpu_custom_call.1} parent=5 // pred_region
        %s717 = ssub.s32 %s41, 1
        %s718 = sand.u32 %s66, 1
        %s719 = scalar_lea.sflag [#allocation6], %s718
        %s720 = sand.u32 %s66, 1
        %s721 = smul.addr %s720, 8
        %s722 = scalar_lea.vmem [#allocation5], %s721
        // Predicated region
        $region93: #{tpu_custom_call.1} parent=91 // pred_check
          %p723 = pneg %p79
        $region94: #{tpu_custom_call.1} parent=91 // pred_check_branch
          %725 = sbr.rel (%p723) target = $region96
        $region95: #{tpu_custom_call.1} parent=91 // pred_region
          %726 = dma.done %s719, 128
        $region96: #{tpu_custom_call.1} parent=91 // pred_fallthru
          _
        %s727 = sand.u32 %s46, 1
        %s728 = scalar_lea.sflag [#allocation9], %s727
        %s729 = sand.u32 %s92, 1
        %s730 = scalar_lea.vmem [#allocation8], %s729
        // Predicated region
        $region97: #{tpu_custom_call.1} parent=91 // pred_check
          %p731 = pneg %p105
        $region98: #{tpu_custom_call.1} parent=91 // pred_check_branch
          %733 = sbr.rel (%p731) target = $region100
        $region99: #{tpu_custom_call.1} parent=91 // pred_region
          %734 = dma.done %s728, 16
        $region100: #{tpu_custom_call.1} parent=91 // pred_fallthru
          _
        // Predicated region
        $region101: #{tpu_custom_call.1} parent=91 // pred_check
          %p735 = pneg %p126
        $region102: #{tpu_custom_call.1} parent=91 // pred_check_branch
          %737 = sbr.rel (%p735) target = $region104
        $region103: #{tpu_custom_call.1} parent=91 // pred_region
          %738 = dma.done [#allocation9], 256
        $region104: #{tpu_custom_call.1} parent=91 // pred_fallthru
          _
        // Predicated region
        $region105: #{tpu_custom_call.1} parent=91 // pred_check
          %p739 = pneg %p147
        $region106: #{tpu_custom_call.1} parent=91 // pred_check_branch
          %741 = sbr.rel (%p739) target = $region108
        $region107: #{tpu_custom_call.1} parent=91 // pred_region
          %742 = dma.done [#allocation12], 16
        $region108: #{tpu_custom_call.1} parent=91 // pred_fallthru
          _
        // Predicated region
        $region109: #{tpu_custom_call.1} parent=91 // pred_check
          %p743 = pneg %p168
        $region110: #{tpu_custom_call.1} parent=91 // pred_check_branch
          %745 = sbr.rel (%p743) target = $region112
        $region111: #{tpu_custom_call.1} parent=91 // pred_region
          %746 = dma.done [#allocation12], 256
        $region112: #{tpu_custom_call.1} parent=91 // pred_fallthru
          _
        // Predicated region
        $region113: #{tpu_custom_call.1} parent=91 // pred_check
          %p747 = pneg %p189
        $region114: #{tpu_custom_call.1} parent=91 // pred_check_branch
          %749 = sbr.rel (%p747) target = $region116
        $region115: #{tpu_custom_call.1} parent=91 // pred_region
          %750 = dma.done [#allocation15], 16
        $region116: #{tpu_custom_call.1} parent=91 // pred_fallthru
          _
        // Predicated region
        $region117: #{tpu_custom_call.1} parent=91 // pred_check
          %p751 = pneg %p210
        $region118: #{tpu_custom_call.1} parent=91 // pred_check_branch
          %753 = sbr.rel (%p751) target = $region120
        $region119: #{tpu_custom_call.1} parent=91 // pred_region
          %754 = dma.done [#allocation15], 256
        $region120: #{tpu_custom_call.1} parent=91 // pred_fallthru
          _
        // Predicated region
        $region121: #{tpu_custom_call.1} parent=91 // pred_check
          %p755 = pneg %p231
        $region122: #{tpu_custom_call.1} parent=91 // pred_check_branch
          %757 = sbr.rel (%p755) target = $region124
        $region123: #{tpu_custom_call.1} parent=91 // pred_region
          %758 = dma.done [#allocation18], 16
        $region124: #{tpu_custom_call.1} parent=91 // pred_fallthru
          _
        // Predicated region
        $region125: #{tpu_custom_call.1} parent=91 // pred_check
          %p759 = pneg %p252
        $region126: #{tpu_custom_call.1} parent=91 // pred_check_branch
          %761 = sbr.rel (%p759) target = $region128
        $region127: #{tpu_custom_call.1} parent=91 // pred_region
          %762 = dma.done [#allocation18], 256
        $region128: #{tpu_custom_call.1} parent=91 // pred_fallthru
          _
        // Predicated region
        $region129: #{tpu_custom_call.1} parent=91 // pred_check
          %p763 = pneg %p273
        $region130: #{tpu_custom_call.1} parent=91 // pred_check_branch
          %765 = sbr.rel (%p763) target = $region132
        $region131: #{tpu_custom_call.1} parent=91 // pred_region
          %766 = dma.done [#allocation21], 16
        $region132: #{tpu_custom_call.1} parent=91 // pred_fallthru
          _
        // Predicated region
        $region133: #{tpu_custom_call.1} parent=91 // pred_check
          %p767 = pneg %p294
        $region134: #{tpu_custom_call.1} parent=91 // pred_check_branch
          %769 = sbr.rel (%p767) target = $region136
        $region135: #{tpu_custom_call.1} parent=91 // pred_region
          %770 = dma.done [#allocation21], 256
        $region136: #{tpu_custom_call.1} parent=91 // pred_fallthru
          _
        // Predicated region
        $region137: #{tpu_custom_call.1} parent=91 // pred_check
          %p771 = pneg %p315
        $region138: #{tpu_custom_call.1} parent=91 // pred_check_branch
          %773 = sbr.rel (%p771) target = $region140
        $region139: #{tpu_custom_call.1} parent=91 // pred_region
          %774 = dma.done [#allocation24], 16
        $region140: #{tpu_custom_call.1} parent=91 // pred_fallthru
          _
        // Predicated region
        $region141: #{tpu_custom_call.1} parent=91 // pred_check
          %p775 = pneg %p336
        $region142: #{tpu_custom_call.1} parent=91 // pred_check_branch
          %777 = sbr.rel (%p775) target = $region144
        $region143: #{tpu_custom_call.1} parent=91 // pred_region
          %778 = dma.done [#allocation24], 512
        $region144: #{tpu_custom_call.1} parent=91 // pred_fallthru
          _
        // Predicated region
        $region145: #{tpu_custom_call.1} parent=91 // pred_check
          %p779 = pneg %p357
        $region146: #{tpu_custom_call.1} parent=91 // pred_check_branch
          %781 = sbr.rel (%p779) target = $region148
        $region147: #{tpu_custom_call.1} parent=91 // pred_region
          %782 = dma.done [#allocation27], 16
        $region148: #{tpu_custom_call.1} parent=91 // pred_fallthru
          _
        // Predicated region
        $region149: #{tpu_custom_call.1} parent=91 // pred_check
          %p783 = pneg %p378
        $region150: #{tpu_custom_call.1} parent=91 // pred_check_branch
          %785 = sbr.rel (%p783) target = $region152
        $region151: #{tpu_custom_call.1} parent=91 // pred_region
          %786 = dma.done [#allocation27], 16
        $region152: #{tpu_custom_call.1} parent=91 // pred_fallthru
          _
        // Predicated region
        $region153: #{tpu_custom_call.1} parent=91 // pred_check
          %p787 = pneg %p399
        $region154: #{tpu_custom_call.1} parent=91 // pred_check_branch
          %789 = sbr.rel (%p787) target = $region156
        $region155: #{tpu_custom_call.1} parent=91 // pred_region
          %790 = dma.done [#allocation30], 16
        $region156: #{tpu_custom_call.1} parent=91 // pred_fallthru
          _
        // Predicated region
        $region157: #{tpu_custom_call.1} parent=91 // pred_check
          %p791 = pneg %p420
        $region158: #{tpu_custom_call.1} parent=91 // pred_check_branch
          %793 = sbr.rel (%p791) target = $region160
        $region159: #{tpu_custom_call.1} parent=91 // pred_region
          %794 = dma.done [#allocation30], 16
        $region160: #{tpu_custom_call.1} parent=91 // pred_fallthru
          _
        // Predicated region
        $region161: #{tpu_custom_call.1} parent=91 // pred_check
          %p795 = pneg %p441
        $region162: #{tpu_custom_call.1} parent=91 // pred_check_branch
          %797 = sbr.rel (%p795) target = $region164
        $region163: #{tpu_custom_call.1} parent=91 // pred_region
          %798 = dma.done [#allocation33], 16
        $region164: #{tpu_custom_call.1} parent=91 // pred_fallthru
          _
        %s799 = sand.u32 %s66, 1
        %s800 = scalar_lea.sflag [#allocation6], %s799
        %s801 = sand.u32 %s66, 1
        %s802 = smul.addr %s801, 8
        %s803 = scalar_lea.vmem [#allocation5], %s802
        %p804 = pneg %p79
        %p805 = pneg %p76
        %s806 = sand.u32 %s46, 1
        %s807 = scalar_lea.sflag [#allocation9], %s806
        %s808 = sand.u32 %s92, 1
        %s809 = scalar_lea.vmem [#allocation8], %s808
        %p810 = pneg %p105
        %p811 = pneg %p102
        %p812 = pneg %p126
        %p813 = pneg %p123
        %p814 = pneg %p147
        %p815 = pneg %p144
        %p816 = pneg %p168
        %p817 = pneg %p165
        %p818 = pneg %p189
        %p819 = pneg %p186
        %p820 = pneg %p210
        %p821 = pneg %p207
        %p822 = pneg %p231
        %p823 = pneg %p228
        %p824 = pneg %p252
        %p825 = pneg %p249
        %p826 = pneg %p273
        %p827 = pneg %p270
        %p828 = pneg %p294
        %p829 = pneg %p291
        %p830 = pneg %p315
        %p831 = pneg %p312
        %p832 = pneg %p336
        %p833 = pneg %p333
        %p834 = pneg %p357
        %p835 = pneg %p354
        %p836 = pneg %p378
        %p837 = pneg %p375
        %p838 = pneg %p399
        %p839 = pneg %p396
        %p840 = pneg %p420
        %p841 = pneg %p417
        %p842 = pneg %p441
        %p843 = pneg %p438
        %p844 = pneg %p469
        %p845 = pneg %p466
        %s846 = sand.u32 %s456, 1
        %s847 = scalar_lea.sflag [#allocation7], %s846
        %s848 = sand.u32 %s456, 1
        %s849 = smul.addr %s848, 8
        %s850 = scalar_lea.vmem [#allocation34], %s849
        %p852 = scmp.eq.s32.totalorder %s51, 0
        // Predicated region
        $region165: #{tpu_custom_call.1} parent=91 // pred_check
          %p853 = pneg %p852
        $region166: #{tpu_custom_call.1} parent=91 // pred_check_branch
          %855 = sbr.rel (%p853) target = $region168
        $region167: #{tpu_custom_call.1} parent=91 // pred_region
          %v856 = vld [vmem:[%s722] sm:$0xff]
          %v857 = vld [vmem:[#allocation28] sm:$0x1]
          %v858 = vld [vmem:[#allocation29] sm:$0x1]
          %vm859 = vcmask 261120
          %v860 = vsel %vm859, %v856, 0.0
          %861 = vadd.xlane.f32.xlu0 %v860
          %v862 = vpop.xlane.xlu0 %861
          %v863 = vrcp.pop 32.0
          %v864 = vmul.f32 %v862, %v863
          %v865 = vsub.f32 %v856, %v864
          %v866 = vmul.f32 %v865, %v865
          %v867 = vsel %vm859, %v866, 0.0
          %868 = vadd.xlane.f32.xlu0 %v867
          %v869 = vpop.xlane.xlu0 %868
          %v870 = vmul.f32 %v869, 0.032258064
          %v871 = vrsqrt.pop %v870
          %v872 = vmul.f32 %v870, %v871
          %vm873 = vcmp.eq.f32.partialorder %v870, inf
          %v874 = vsel %vm873, %v870, %v872
          %vm875 = vcmp.eq.f32.partialorder %v870, 0.0
          %v876 = vand.u32 %v870, 2147483648
          %v877 = vsel %vm875, %v876, %v874
          %v879 = vlaneseq
          %v880 = vshrl.u32 %v879, 7
          %v881 = vsub.s32 0, %v880
          %v882 = vrot.slane %v857, %v881
          %v884 = vmul.f32 %v882, %v865
          %v885 = vadd.f32 %v877, 1e-06
          %v886 = vrcp.pop %v885
          %v887 = vmul.f32 %v884, %v886
          %v889 = vlaneseq
          %v890 = vshrl.u32 %v889, 7
          %v891 = vsub.s32 0, %v890
          %v892 = vrot.slane %v858, %v891
          %v894 = vadd.f32 %v887, %v892
          %v895 = vpack.c.bf16 %v894, %v894
          %vm896 = vcmask 257024
          %897 = vst.msk [vmem:[#allocation2] sm:$0xf] %vm896, %v895
          %v898 = vld [vmem:[#allocation13] sm:$0xf]
          %v899 = vld [vmem:[#allocation13 + $0x4] sm:$0xf]
          %v900 = vld [vmem:[#allocation13 + $0x8] sm:$0xf]
          %v901 = vld [vmem:[#allocation13 + $0xc] sm:$0xf]
          %v902 = vld [vmem:[#allocation14] sm:$0x1]
          %v904 = vlaneseq
          %v905 = vshrl.u32 %v904, 7
          %v906 = vsub.s32 0, %v905
          %v907 = vrot.slane %v902, %v906
          %v913 = vunpack.c.l.b16 %v898
          %v914 = vunpack.c.l.b16 %v899
          %v915 = vunpack.c.l.b16 %v900
          %v916 = vunpack.c.l.b16 %v901
          %v917 = vpack.c.b16 %v914, %v913
          %v918 = vpack.c.b16 %v916, %v915
          %v922 = vsel %vm859, %v895, 0
          %924 = vmatprep.subr.bf16.mxu0 0
          %925 = vmatpush1.bf16.msra.mxu0 %v917
          %926 = vmatprep.subr.bf16.mxu0 0
          %927 = vmatpush1.bf16.msra.mxu0 %v918
          %928 = vmatprep.subr.bf16.mxu0 0
          %929 = vmatpush1.bf16.msra.mxu0 0
          %930 = vmatprep.subr.bf16.mxu0 0
          %931 = vmatpush1.bf16.msra.mxu0 0
          %932 = vmatprep.subr.bf16.mxu0 0
          %933 = vmatpush1.bf16.msra.mxu0 0
          %934 = vmatprep.subr.bf16.mxu0 0
          %935 = vmatpush1.bf16.msra.mxu0 0
          %936 = vmatprep.subr.bf16.mxu0 0
          %937 = vmatpush1.bf16.msra.mxu0 0
          %938 = vmatprep.subr.bf16.mxu0 0
          %939 = vmatpush1.bf16.msra.mxu0 0
          %940 = vmatprep.subr.bf16.mxu0 0
          %941 = vmatpush1.bf16.msra.mxu0 0
          %942 = vmatprep.subr.bf16.mxu0 0
          %943 = vmatpush1.bf16.msra.mxu0 0
          %944 = vmatprep.subr.bf16.mxu0 0
          %945 = vmatpush1.bf16.msra.mxu0 0
          %946 = vmatprep.subr.bf16.mxu0 0
          %947 = vmatpush1.bf16.msra.mxu0 0
          %948 = vmatprep.subr.bf16.mxu0 0
          %949 = vmatpush1.bf16.msra.mxu0 0
          %950 = vmatprep.subr.bf16.mxu0 0
          %951 = vmatpush1.bf16.msra.mxu0 0
          %952 = vmatprep.subr.bf16.mxu0 0
          %953 = vmatpush1.bf16.msra.mxu0 0
          %954 = vmatprep.subr.bf16.mxu0 0
          %955 = vmatpush1.bf16.msra.mxu0 0
          %956 = vmatprep.mubr.bf16.mxu0 0
          %957 = vmatmul.mubr.bf16.gmra.mrb[0].mxu0 %v922
          %v958 = vpop.f32.mrb[0].mxu0
          %v959 = vadd.f32 %v907, %v958
          %v960 = vpop.f32.mrb[0].mxu0
          %v961 = vpop.f32.mrb[0].mxu0
          %v962 = vpop.f32.mrb[0].mxu0
          %963 = vdwg.mxu0
          %v964 = vld [vmem:[#allocation16] sm:$0xf]
          %v965 = vld [vmem:[#allocation16 + $0x4] sm:$0xf]
          %v966 = vld [vmem:[#allocation16 + $0x8] sm:$0xf]
          %v967 = vld [vmem:[#allocation16 + $0xc] sm:$0xf]
          %v968 = vld [vmem:[#allocation17] sm:$0x1]
          %v970 = vlaneseq
          %v971 = vshrl.u32 %v970, 7
          %v972 = vsub.s32 0, %v971
          %v973 = vrot.slane %v968, %v972
          %v979 = vunpack.c.l.b16 %v964
          %v980 = vunpack.c.l.b16 %v965
          %v981 = vunpack.c.l.b16 %v966
          %v982 = vunpack.c.l.b16 %v967
          %v983 = vpack.c.b16 %v980, %v979
          %v984 = vpack.c.b16 %v982, %v981
          %987 = vmatprep.subr.bf16.mxu0 0
          %988 = vmatpush1.bf16.msra.mxu0 %v983
          %989 = vmatprep.subr.bf16.mxu0 0
          %990 = vmatpush1.bf16.msra.mxu0 %v984
          %991 = vmatprep.subr.bf16.mxu0 0
          %992 = vmatpush1.bf16.msra.mxu0 0
          %993 = vmatprep.subr.bf16.mxu0 0
          %994 = vmatpush1.bf16.msra.mxu0 0
          %995 = vmatprep.subr.bf16.mxu0 0
          %996 = vmatpush1.bf16.msra.mxu0 0
          %997 = vmatprep.subr.bf16.mxu0 0
          %998 = vmatpush1.bf16.msra.mxu0 0
          %999 = vmatprep.subr.bf16.mxu0 0
          %1000 = vmatpush1.bf16.msra.mxu0 0
          %1001 = vmatprep.subr.bf16.mxu0 0
          %1002 = vmatpush1.bf16.msra.mxu0 0
          %1003 = vmatprep.subr.bf16.mxu0 0
          %1004 = vmatpush1.bf16.msra.mxu0 0
          %1005 = vmatprep.subr.bf16.mxu0 0
          %1006 = vmatpush1.bf16.msra.mxu0 0
          %1007 = vmatprep.subr.bf16.mxu0 0
          %1008 = vmatpush1.bf16.msra.mxu0 0
          %1009 = vmatprep.subr.bf16.mxu0 0
          %1010 = vmatpush1.bf16.msra.mxu0 0
          %1011 = vmatprep.subr.bf16.mxu0 0
          %1012 = vmatpush1.bf16.msra.mxu0 0
          %1013 = vmatprep.subr.bf16.mxu0 0
          %1014 = vmatpush1.bf16.msra.mxu0 0
          %1015 = vmatprep.subr.bf16.mxu0 0
          %1016 = vmatpush1.bf16.msra.mxu0 0
          %1017 = vmatprep.subr.bf16.mxu0 0
          %1018 = vmatpush1.bf16.msra.mxu0 0
          %1019 = vmatprep.mubr.bf16.mxu0 0
          %1020 = vmatmul.mubr.bf16.gmra.mrb[0].mxu0 %v922
          %v1021 = vpop.f32.mrb[0].mxu0
          %v1022 = vadd.f32 %v973, %v1021
          %v1023 = vpop.f32.mrb[0].mxu0
          %v1024 = vpop.f32.mrb[0].mxu0
          %v1025 = vpop.f32.mrb[0].mxu0
          %1026 = vdwg.mxu0
          %1028 = vrot.lane.b32.xlu0 %v1022, 120
          %v1029 = vpop.permute.xlu0 %1028
          %1031 = vrot.lane.b32.xlu0 %v1022, 112
          %v1032 = vpop.permute.xlu0 %1031
          %1034 = vrot.lane.b32.xlu0 %v1022, 104
          %v1035 = vpop.permute.xlu0 %1034
          %v1037 = vcombine.low %v1022, %v1032
          %v1038 = vcombine.high %v1022, %v1032
          %v1040 = vunpack.c.l.s4 1983009808
          %v1041 = vunpack.c.0.s8 %v1040
          %v1042 = vlaneseq
          %v1043 = vshrl.u32 %v1042, 7
          %v1044 = vsub.s32 %v1041, %v1043
          %v1045 = vrot.slane %v1037, %v1044
          %v1047 = vunpack.c.l.s4 1983009808
          %v1048 = vunpack.c.0.s8 %v1047
          %v1049 = vlaneseq
          %v1050 = vshrl.u32 %v1049, 7
          %v1051 = vsub.s32 %v1048, %v1050
          %v1052 = vrot.slane %v1038, %v1051
          %v1053 = vcombine.low %v1029, %v1035
          %v1054 = vcombine.high %v1029, %v1035
          %v1056 = vunpack.c.l.s4 1983009808
          %v1057 = vunpack.c.0.s8 %v1056
          %v1058 = vlaneseq
          %v1059 = vshrl.u32 %v1058, 7
          %v1060 = vsub.s32 %v1057, %v1059
          %v1061 = vrot.slane %v1053, %v1060
          %v1063 = vunpack.c.l.s4 1983009808
          %v1064 = vunpack.c.0.s8 %v1063
          %v1065 = vlaneseq
          %v1066 = vshrl.u32 %v1065, 7
          %v1067 = vsub.s32 %v1064, %v1066
          %v1068 = vrot.slane %v1054, %v1067
          %v1069 = vcombine.low %v1045, %v1061
          %v1070 = vcombine.high %v1045, %v1061
          %v1072 = vunpack.c.l.s4 1934713408
          %v1073 = vunpack.c.0.s8 %v1072
          %v1074 = vlaneseq
          %v1075 = vshrl.u32 %v1074, 7
          %v1076 = vsub.s32 %v1073, %v1075
          %v1077 = vrot.slane %v1069, %v1076
          %v1079 = vunpack.c.l.s4 1934713408
          %v1080 = vunpack.c.0.s8 %v1079
          %v1081 = vlaneseq
          %v1082 = vshrl.u32 %v1081, 7
          %v1083 = vsub.s32 %v1080, %v1082
          %v1084 = vrot.slane %v1070, %v1083
          %v1085 = vcombine.low %v1052, %v1068
          %v1086 = vcombine.high %v1052, %v1068
          %v1088 = vunpack.c.l.s4 1934713408
          %v1089 = vunpack.c.0.s8 %v1088
          %v1090 = vlaneseq
          %v1091 = vshrl.u32 %v1090, 7
          %v1092 = vsub.s32 %v1089, %v1091
          %v1093 = vrot.slane %v1085, %v1092
          %v1095 = vunpack.c.l.s4 1934713408
          %v1096 = vunpack.c.0.s8 %v1095
          %v1097 = vlaneseq
          %v1098 = vshrl.u32 %v1097, 7
          %v1099 = vsub.s32 %v1096, %v1098
          %v1100 = vrot.slane %v1086, %v1099
          %v1101 = vcombine.high %v1077, 0.0
          %v1102 = vcombine.high %v1084, 0.0
          %v1103 = vcombine.high %v1093, 0.0
          %v1104 = vcombine.high %v1100, 0.0
          %v1105 = vcombine.low %v1077, %v1084
          %v1107 = vunpack.c.l.s4 1983009808
          %v1108 = vunpack.c.0.s8 %v1107
          %v1109 = vlaneseq
          %v1110 = vshrl.u32 %v1109, 7
          %v1111 = vsub.s32 %v1108, %v1110
          %v1112 = vrot.slane %v1105, %v1111
          %v1113 = vcombine.low %v1101, %v1102
          %v1115 = vunpack.c.l.s4 1983009808
          %v1116 = vunpack.c.0.s8 %v1115
          %v1117 = vlaneseq
          %v1118 = vshrl.u32 %v1117, 7
          %v1119 = vsub.s32 %v1116, %v1118
          %v1120 = vrot.slane %v1113, %v1119
          %v1121 = vcombine.low %v1093, %v1100
          %v1123 = vunpack.c.l.s4 1983009808
          %v1124 = vunpack.c.0.s8 %v1123
          %v1125 = vlaneseq
          %v1126 = vshrl.u32 %v1125, 7
          %v1127 = vsub.s32 %v1124, %v1126
          %v1128 = vrot.slane %v1121, %v1127
          %v1129 = vcombine.low %v1103, %v1104
          %v1131 = vunpack.c.l.s4 1983009808
          %v1132 = vunpack.c.0.s8 %v1131
          %v1133 = vlaneseq
          %v1134 = vshrl.u32 %v1133, 7
          %v1135 = vsub.s32 %v1132, %v1134
          %v1136 = vrot.slane %v1129, %v1135
          %v1137 = vcombine.low %v1112, %v1120
          %v1138 = vcombine.high %v1112, %v1120
          %v1140 = vunpack.c.l.s4 1934713408
          %v1141 = vunpack.c.0.s8 %v1140
          %v1142 = vlaneseq
          %v1143 = vshrl.u32 %v1142, 7
          %v1144 = vsub.s32 %v1141, %v1143
          %v1145 = vrot.slane %v1137, %v1144
          %v1147 = vunpack.c.l.s4 1934713408
          %v1148 = vunpack.c.0.s8 %v1147
          %v1149 = vlaneseq
          %v1150 = vshrl.u32 %v1149, 7
          %v1151 = vsub.s32 %v1148, %v1150
          %v1152 = vrot.slane %v1138, %v1151
          %v1153 = vcombine.low %v1128, %v1136
          %v1154 = vcombine.high %v1128, %v1136
          %v1156 = vunpack.c.l.s4 1934713408
          %v1157 = vunpack.c.0.s8 %v1156
          %v1158 = vlaneseq
          %v1159 = vshrl.u32 %v1158, 7
          %v1160 = vsub.s32 %v1157, %v1159
          %v1161 = vrot.slane %v1153, %v1160
          %v1163 = vunpack.c.l.s4 1934713408
          %v1164 = vunpack.c.0.s8 %v1163
          %v1165 = vlaneseq
          %v1166 = vshrl.u32 %v1165, 7
          %v1167 = vsub.s32 %v1164, %v1166
          %v1168 = vrot.slane %v1154, %v1167
          %v1169 = vcombine.low %v1145, %v1161
          %v1170 = vcombine.high %v1145, %v1161
          %v1171 = vcombine.low %v1152, %v1168
          %v1172 = vcombine.high %v1152, %v1168
          %v1173 = vpack.c.bf16 %v1169, %v1169
          %v1174 = vpack.c.bf16 %v1170, %v1170
          %v1175 = vpack.c.bf16 %v1171, %v1171
          %v1176 = vpack.c.bf16 %v1172, %v1172
          %vm1177 = vcmask 60416
          %1178 = vst.msk [vmem:[#allocation4] sm:$0xf] %vm1177, %v1173
          %1179 = vst.msk [vmem:[#allocation4 + $0x4] sm:$0xf] %vm1177, %v1174
          %1180 = vst.msk [vmem:[#allocation4 + $0x8] sm:$0xf] %vm1177, %v1175
          %1181 = vst.msk [vmem:[#allocation4 + $0xc] sm:$0xf] %vm1177, %v1176
          %1182 = vxpose.xlu0.b32.start [1/16] %v959, 128
          %1183 = vxpose.xlu0.b32.cont [2/16] 0.0, 128
          %1184 = vxpose.xlu0.b32.cont [3/16] 0.0, 128
          %1185 = vxpose.xlu0.b32.cont [4/16] 0.0, 128
          %1186 = vxpose.xlu0.b32.cont [5/16] 0.0, 128
          %1187 = vxpose.xlu0.b32.cont [6/16] 0.0, 128
          %1188 = vxpose.xlu0.b32.cont [7/16] 0.0, 128
          %1189 = vxpose.xlu0.b32.cont [8/16] 0.0, 128
          %1190 = vxpose.xlu0.b32.cont [9/16] 0.0, 128
          %1191 = vxpose.xlu0.b32.cont [10/16] 0.0, 128
          %1192 = vxpose.xlu0.b32.cont [11/16] 0.0, 128
          %1193 = vxpose.xlu0.b32.cont [12/16] 0.0, 128
          %1194 = vxpose.xlu0.b32.cont [13/16] 0.0, 128
          %1195 = vxpose.xlu0.b32.cont [14/16] 0.0, 128
          %1196 = vxpose.xlu0.b32.cont [15/16] 0.0, 128
          %1197 = vxpose.xlu0.b32.end [16/16] 0.0, 128
          %v1198 = vpop.trf.xlu0
          %v1199 = vpop.trf.xlu0
          %v1200 = vpop.trf.xlu0
          %v1201 = vpop.trf.xlu0
          %v1202 = vpop.trf.xlu0
          %v1203 = vpop.trf.xlu0
          %v1204 = vpop.trf.xlu0
          %v1205 = vpop.trf.xlu0
          %v1206 = vpop.trf.xlu0
          %v1207 = vpop.trf.xlu0
          %v1208 = vpop.trf.xlu0
          %v1209 = vpop.trf.xlu0
          %v1210 = vpop.trf.xlu0
          %v1211 = vpop.trf.xlu0
          %v1212 = vpop.trf.xlu0
          %v1213 = vpop.trf.xlu0
          %v1214 = vpack.c.bf16 %v1198, %v1198
          %1215 = vst.msk [vmem:[#allocation3] sm:$0xf] %vm1177, %v1214
          %1217 = vrot.lane.b32.xlu0 %v959, 120
          %v1218 = vpop.permute.xlu0 %1217
          %1220 = vxpose.xlu0.b32.start [1/16] %v1218, 128
          %1221 = vxpose.xlu0.b32.cont [2/16] 0.0, 128
          %1222 = vxpose.xlu0.b32.cont [3/16] 0.0, 128
          %1223 = vxpose.xlu0.b32.cont [4/16] 0.0, 128
          %1224 = vxpose.xlu0.b32.cont [5/16] 0.0, 128
          %1225 = vxpose.xlu0.b32.cont [6/16] 0.0, 128
          %1226 = vxpose.xlu0.b32.cont [7/16] 0.0, 128
          %1227 = vxpose.xlu0.b32.cont [8/16] 0.0, 128
          %1228 = vxpose.xlu0.b32.cont [9/16] 0.0, 128
          %1229 = vxpose.xlu0.b32.cont [10/16] 0.0, 128
          %1230 = vxpose.xlu0.b32.cont [11/16] 0.0, 128
          %1231 = vxpose.xlu0.b32.cont [12/16] 0.0, 128
          %1232 = vxpose.xlu0.b32.cont [13/16] 0.0, 128
          %1233 = vxpose.xlu0.b32.cont [14/16] 0.0, 128
          %1234 = vxpose.xlu0.b32.cont [15/16] 0.0, 128
          %1235 = vxpose.xlu0.b32.end [16/16] 0.0, 128
          %v1236 = vpop.trf.xlu0
          %v1237 = vpop.trf.xlu0
          %v1238 = vpop.trf.xlu0
          %v1239 = vpop.trf.xlu0
          %v1240 = vpop.trf.xlu0
          %v1241 = vpop.trf.xlu0
          %v1242 = vpop.trf.xlu0
          %v1243 = vpop.trf.xlu0
          %v1244 = vpop.trf.xlu0
          %v1245 = vpop.trf.xlu0
          %v1246 = vpop.trf.xlu0
          %v1247 = vpop.trf.xlu0
          %v1248 = vpop.trf.xlu0
          %v1249 = vpop.trf.xlu0
          %v1250 = vpop.trf.xlu0
          %v1251 = vpop.trf.xlu0
          %v1252 = vpack.c.bf16 %v1236, %v1236
          %s1253 = scalar_lea.vmem [#allocation3], 4
          %1254 = vst.msk [vmem:[%s1253] sm:$0xf] %vm1177, %v1252
          %1255 = vrot.lane.b32.xlu0 %v959, 112
          %v1256 = vpop.permute.xlu0 %1255
          %1258 = vxpose.xlu0.b32.start [1/16] %v1256, 128
          %1259 = vxpose.xlu0.b32.cont [2/16] 0.0, 128
          %1260 = vxpose.xlu0.b32.cont [3/16] 0.0, 128
          %1261 = vxpose.xlu0.b32.cont [4/16] 0.0, 128
          %1262 = vxpose.xlu0.b32.cont [5/16] 0.0, 128
          %1263 = vxpose.xlu0.b32.cont [6/16] 0.0, 128
          %1264 = vxpose.xlu0.b32.cont [7/16] 0.0, 128
          %1265 = vxpose.xlu0.b32.cont [8/16] 0.0, 128
          %1266 = vxpose.xlu0.b32.cont [9/16] 0.0, 128
          %1267 = vxpose.xlu0.b32.cont [10/16] 0.0, 128
          %1268 = vxpose.xlu0.b32.cont [11/16] 0.0, 128
          %1269 = vxpose.xlu0.b32.cont [12/16] 0.0, 128
          %1270 = vxpose.xlu0.b32.cont [13/16] 0.0, 128
          %1271 = vxpose.xlu0.b32.cont [14/16] 0.0, 128
          %1272 = vxpose.xlu0.b32.cont [15/16] 0.0, 128
          %1273 = vxpose.xlu0.b32.end [16/16] 0.0, 128
          %v1274 = vpop.trf.xlu0
          %v1275 = vpop.trf.xlu0
          %v1276 = vpop.trf.xlu0
          %v1277 = vpop.trf.xlu0
          %v1278 = vpop.trf.xlu0
          %v1279 = vpop.trf.xlu0
          %v1280 = vpop.trf.xlu0
          %v1281 = vpop.trf.xlu0
          %v1282 = vpop.trf.xlu0
          %v1283 = vpop.trf.xlu0
          %v1284 = vpop.trf.xlu0
          %v1285 = vpop.trf.xlu0
          %v1286 = vpop.trf.xlu0
          %v1287 = vpop.trf.xlu0
          %v1288 = vpop.trf.xlu0
          %v1289 = vpop.trf.xlu0
          %v1290 = vpack.c.bf16 %v1274, %v1274
          %s1291 = scalar_lea.vmem [#allocation3], 8
          %1292 = vst.msk [vmem:[%s1291] sm:$0xf] %vm1177, %v1290
          %1293 = vrot.lane.b32.xlu0 %v959, 104
          %v1294 = vpop.permute.xlu0 %1293
          %1296 = vxpose.xlu0.b32.start [1/16] %v1294, 128
          %1297 = vxpose.xlu0.b32.cont [2/16] 0.0, 128
          %1298 = vxpose.xlu0.b32.cont [3/16] 0.0, 128
          %1299 = vxpose.xlu0.b32.cont [4/16] 0.0, 128
          %1300 = vxpose.xlu0.b32.cont [5/16] 0.0, 128
          %1301 = vxpose.xlu0.b32.cont [6/16] 0.0, 128
          %1302 = vxpose.xlu0.b32.cont [7/16] 0.0, 128
          %1303 = vxpose.xlu0.b32.cont [8/16] 0.0, 128
          %1304 = vxpose.xlu0.b32.cont [9/16] 0.0, 128
          %1305 = vxpose.xlu0.b32.cont [10/16] 0.0, 128
          %1306 = vxpose.xlu0.b32.cont [11/16] 0.0, 128
          %1307 = vxpose.xlu0.b32.cont [12/16] 0.0, 128
          %1308 = vxpose.xlu0.b32.cont [13/16] 0.0, 128
          %1309 = vxpose.xlu0.b32.cont [14/16] 0.0, 128
          %1310 = vxpose.xlu0.b32.cont [15/16] 0.0, 128
          %1311 = vxpose.xlu0.b32.end [16/16] 0.0, 128
          %v1312 = vpop.trf.xlu0
          %v1313 = vpop.trf.xlu0
          %v1314 = vpop.trf.xlu0
          %v1315 = vpop.trf.xlu0
          %v1316 = vpop.trf.xlu0
          %v1317 = vpop.trf.xlu0
          %v1318 = vpop.trf.xlu0
          %v1319 = vpop.trf.xlu0
          %v1320 = vpop.trf.xlu0
          %v1321 = vpop.trf.xlu0
          %v1322 = vpop.trf.xlu0
          %v1323 = vpop.trf.xlu0
          %v1324 = vpop.trf.xlu0
          %v1325 = vpop.trf.xlu0
          %v1326 = vpop.trf.xlu0
          %v1327 = vpop.trf.xlu0
          %v1328 = vpack.c.bf16 %v1312, %v1312
          %s1329 = scalar_lea.vmem [#allocation3], 12
          %1330 = vst.msk [vmem:[%s1329] sm:$0xf] %vm1177, %v1328
        $region168: #{tpu_custom_call.1} parent=91 // pred_fallthru
          _
        %s1331 = smul.u32 %s51, 8
        %s1332 = scalar_lea.vmem %s722, %s1331 [#allocation5]
        %v1333 = vld [vmem:[%s1332] sm:$0xff]
        %s1334 = sshra.s32 %s1331, 3
        %s1335 = sand.u32 %s1331, 7
        %s1336 = smul.addr %s1334, 4
        %s1337 = scalar_lea.vmem [#allocation2], %s1336
        %v1338 = vld [vmem:[%s1337] sm:$0xf]
        %v1339 = vld [vmem:[#allocation10] sm:$0xf]
        %v1340 = vld [vmem:[#allocation10 + $0x4] sm:$0xf]
        %v1341 = vld [vmem:[#allocation10 + $0x8] sm:$0xf]
        %v1342 = vld [vmem:[#allocation10 + $0xc] sm:$0xf]
        %v1343 = vld [vmem:[#allocation11] sm:$0x1]
        %v1345 = vlaneseq
        %v1346 = vshrl.u32 %v1345, 7
        %v1347 = vsub.s32 0, %v1346
        %v1348 = vrot.slane %v1343, %v1347
        %v1354 = vunpack.c.l.b16 %v1339
        %v1355 = vunpack.c.l.b16 %v1340
        %v1356 = vunpack.c.l.b16 %v1341
        %v1357 = vunpack.c.l.b16 %v1342
        %v1358 = vpack.c.b16 %v1355, %v1354
        %v1359 = vpack.c.b16 %v1357, %v1356
        %vm1362 = vcmask 261120
        %v1364 = vsel %vm1362, %v1338, 0
        %1366 = vmatprep.subr.bf16.mxu0 0
        %1367 = vmatpush1.bf16.msra.mxu0 %v1358
        %1368 = vmatprep.subr.bf16.mxu0 0
        %1369 = vmatpush1.bf16.msra.mxu0 %v1359
        %1370 = vmatprep.subr.bf16.mxu0 0
        %1371 = vmatpush1.bf16.msra.mxu0 0
        %1372 = vmatprep.subr.bf16.mxu0 0
        %1373 = vmatpush1.bf16.msra.mxu0 0
        %1374 = vmatprep.subr.bf16.mxu0 0
        %1375 = vmatpush1.bf16.msra.mxu0 0
        %1376 = vmatprep.subr.bf16.mxu0 0
        %1377 = vmatpush1.bf16.msra.mxu0 0
        %1378 = vmatprep.subr.bf16.mxu0 0
        %1379 = vmatpush1.bf16.msra.mxu0 0
        %1380 = vmatprep.subr.bf16.mxu0 0
        %1381 = vmatpush1.bf16.msra.mxu0 0
        %1382 = vmatprep.subr.bf16.mxu0 0
        %1383 = vmatpush1.bf16.msra.mxu0 0
        %1384 = vmatprep.subr.bf16.mxu0 0
        %1385 = vmatpush1.bf16.msra.mxu0 0
        %1386 = vmatprep.subr.bf16.mxu0 0
        %1387 = vmatpush1.bf16.msra.mxu0 0
        %1388 = vmatprep.subr.bf16.mxu0 0
        %1389 = vmatpush1.bf16.msra.mxu0 0
        %1390 = vmatprep.subr.bf16.mxu0 0
        %1391 = vmatpush1.bf16.msra.mxu0 0
        %1392 = vmatprep.subr.bf16.mxu0 0
        %1393 = vmatpush1.bf16.msra.mxu0 0
        %1394 = vmatprep.subr.bf16.mxu0 0
        %1395 = vmatpush1.bf16.msra.mxu0 0
        %1396 = vmatprep.subr.bf16.mxu0 0
        %1397 = vmatpush1.bf16.msra.mxu0 0
        %1398 = vmatprep.mubr.bf16.mxu0 0
        %1399 = vmatmul.mubr.bf16.gmra.mrb[0].mxu0 %v1364
        %v1400 = vpop.f32.mrb[0].mxu0
        %v1401 = vadd.f32 %v1348, %v1400
        %v1402 = vpop.f32.mrb[0].mxu0
        %v1403 = vpop.f32.mrb[0].mxu0
        %v1404 = vpop.f32.mrb[0].mxu0
        %1405 = vdwg.mxu0
        %1407 = vrot.lane.b32.xlu0 %v1401, 120
        %v1408 = vpop.permute.xlu0 %1407
        %1410 = vrot.lane.b32.xlu0 %v1401, 112
        %v1411 = vpop.permute.xlu0 %1410
        %1413 = vrot.lane.b32.xlu0 %v1401, 104
        %v1414 = vpop.permute.xlu0 %1413
        %v1416 = vcombine.low %v1401, %v1411
        %v1417 = vcombine.high %v1401, %v1411
        %v1419 = vunpack.c.l.s4 1983009808
        %v1420 = vunpack.c.0.s8 %v1419
        %v1421 = vlaneseq
        %v1422 = vshrl.u32 %v1421, 7
        %v1423 = vsub.s32 %v1420, %v1422
        %v1424 = vrot.slane %v1416, %v1423
        %v1426 = vunpack.c.l.s4 1983009808
        %v1427 = vunpack.c.0.s8 %v1426
        %v1428 = vlaneseq
        %v1429 = vshrl.u32 %v1428, 7
        %v1430 = vsub.s32 %v1427, %v1429
        %v1431 = vrot.slane %v1417, %v1430
        %v1432 = vcombine.low %v1408, %v1414
        %v1433 = vcombine.high %v1408, %v1414
        %v1435 = vunpack.c.l.s4 1983009808
        %v1436 = vunpack.c.0.s8 %v1435
        %v1437 = vlaneseq
        %v1438 = vshrl.u32 %v1437, 7
        %v1439 = vsub.s32 %v1436, %v1438
        %v1440 = vrot.slane %v1432, %v1439
        %v1442 = vunpack.c.l.s4 1983009808
        %v1443 = vunpack.c.0.s8 %v1442
        %v1444 = vlaneseq
        %v1445 = vshrl.u32 %v1444, 7
        %v1446 = vsub.s32 %v1443, %v1445
        %v1447 = vrot.slane %v1433, %v1446
        %v1448 = vcombine.low %v1424, %v1440
        %v1449 = vcombine.high %v1424, %v1440
        %v1451 = vunpack.c.l.s4 1934713408
        %v1452 = vunpack.c.0.s8 %v1451
        %v1453 = vlaneseq
        %v1454 = vshrl.u32 %v1453, 7
        %v1455 = vsub.s32 %v1452, %v1454
        %v1456 = vrot.slane %v1448, %v1455
        %v1458 = vunpack.c.l.s4 1934713408
        %v1459 = vunpack.c.0.s8 %v1458
        %v1460 = vlaneseq
        %v1461 = vshrl.u32 %v1460, 7
        %v1462 = vsub.s32 %v1459, %v1461
        %v1463 = vrot.slane %v1449, %v1462
        %v1464 = vcombine.low %v1431, %v1447
        %v1465 = vcombine.high %v1431, %v1447
        %v1467 = vunpack.c.l.s4 1934713408
        %v1468 = vunpack.c.0.s8 %v1467
        %v1469 = vlaneseq
        %v1470 = vshrl.u32 %v1469, 7
        %v1471 = vsub.s32 %v1468, %v1470
        %v1472 = vrot.slane %v1464, %v1471
        %v1474 = vunpack.c.l.s4 1934713408
        %v1475 = vunpack.c.0.s8 %v1474
        %v1476 = vlaneseq
        %v1477 = vshrl.u32 %v1476, 7
        %v1478 = vsub.s32 %v1475, %v1477
        %v1479 = vrot.slane %v1465, %v1478
        %v1480 = vcombine.high %v1456, 0.0
        %v1481 = vcombine.high %v1463, 0.0
        %v1482 = vcombine.high %v1472, 0.0
        %v1483 = vcombine.high %v1479, 0.0
        %v1484 = vcombine.low %v1456, %v1463
        %v1486 = vunpack.c.l.s4 1983009808
        %v1487 = vunpack.c.0.s8 %v1486
        %v1488 = vlaneseq
        %v1489 = vshrl.u32 %v1488, 7
        %v1490 = vsub.s32 %v1487, %v1489
        %v1491 = vrot.slane %v1484, %v1490
        %v1492 = vcombine.low %v1480, %v1481
        %v1494 = vunpack.c.l.s4 1983009808
        %v1495 = vunpack.c.0.s8 %v1494
        %v1496 = vlaneseq
        %v1497 = vshrl.u32 %v1496, 7
        %v1498 = vsub.s32 %v1495, %v1497
        %v1499 = vrot.slane %v1492, %v1498
        %v1500 = vcombine.low %v1472, %v1479
        %v1502 = vunpack.c.l.s4 1983009808
        %v1503 = vunpack.c.0.s8 %v1502
        %v1504 = vlaneseq
        %v1505 = vshrl.u32 %v1504, 7
        %v1506 = vsub.s32 %v1503, %v1505
        %v1507 = vrot.slane %v1500, %v1506
        %v1508 = vcombine.low %v1482, %v1483
        %v1510 = vunpack.c.l.s4 1983009808
        %v1511 = vunpack.c.0.s8 %v1510
        %v1512 = vlaneseq
        %v1513 = vshrl.u32 %v1512, 7
        %v1514 = vsub.s32 %v1511, %v1513
        %v1515 = vrot.slane %v1508, %v1514
        %v1516 = vcombine.low %v1491, %v1499
        %v1517 = vcombine.high %v1491, %v1499
        %v1519 = vunpack.c.l.s4 1934713408
        %v1520 = vunpack.c.0.s8 %v1519
        %v1521 = vlaneseq
        %v1522 = vshrl.u32 %v1521, 7
        %v1523 = vsub.s32 %v1520, %v1522
        %v1524 = vrot.slane %v1516, %v1523
        %v1526 = vunpack.c.l.s4 1934713408
        %v1527 = vunpack.c.0.s8 %v1526
        %v1528 = vlaneseq
        %v1529 = vshrl.u32 %v1528, 7
        %v1530 = vsub.s32 %v1527, %v1529
        %v1531 = vrot.slane %v1517, %v1530
        %v1532 = vcombine.low %v1507, %v1515
        %v1533 = vcombine.high %v1507, %v1515
        %v1535 = vunpack.c.l.s4 1934713408
        %v1536 = vunpack.c.0.s8 %v1535
        %v1537 = vlaneseq
        %v1538 = vshrl.u32 %v1537, 7
        %v1539 = vsub.s32 %v1536, %v1538
        %v1540 = vrot.slane %v1532, %v1539
        %v1542 = vunpack.c.l.s4 1934713408
        %v1543 = vunpack.c.0.s8 %v1542
        %v1544 = vlaneseq
        %v1545 = vshrl.u32 %v1544, 7
        %v1546 = vsub.s32 %v1543, %v1545
        %v1547 = vrot.slane %v1533, %v1546
        %v1548 = vcombine.low %v1524, %v1540
        %v1549 = vcombine.high %v1524, %v1540
        %v1550 = vcombine.low %v1531, %v1547
        %v1551 = vcombine.high %v1531, %v1547
        %v1552 = vpack.c.bf16 %v1548, %v1548
        %v1553 = vpack.c.bf16 %v1549, %v1549
        %v1554 = vpack.c.bf16 %v1550, %v1550
        %v1555 = vpack.c.bf16 %v1551, %v1551
        %v1556 = vld [vmem:[%s730] sm:$0x1]
        %vm1557 = vcmp.lt.f32.partialorder %v1556, 0.5
        %v1558 = vsel %vm1557, -1e+09, 0.0
        %v1559 = vld [vmem:[#allocation3] sm:$0xf]
        %v1560 = vld [vmem:[#allocation3 + $0x4] sm:$0xf]
        %v1561 = vld [vmem:[#allocation3 + $0x8] sm:$0xf]
        %v1562 = vld [vmem:[#allocation3 + $0xc] sm:$0xf]
        %v1564 = vlaneseq
        %v1565 = vshrl.u32 %v1564, 7
        %v1566 = vsub.s32 0, %v1565
        %v1567 = vrot.slane %v1558, %v1566
        %vm1569 = vcmask 64512
        %v1571 = vsel %vm1569, %v1552, 0
        %vm1573 = vcmask 1043456
        %v1575 = vsel %vm1573, %v1559, 0
        %1577 = vmatprep.subr.bf16.mxu0 0
        %1578 = vmatpush1.bf16.msra.mxu0 %v1575
        %1579 = vmatprep.subr.bf16.mxu0 0
        %1580 = vmatpush1.bf16.msra.mxu0 0
        %1581 = vmatprep.subr.bf16.mxu0 0
        %1582 = vmatpush1.bf16.msra.mxu0 0
        %1583 = vmatprep.subr.bf16.mxu0 0
        %1584 = vmatpush1.bf16.msra.mxu0 0
        %1585 = vmatprep.subr.bf16.mxu0 0
        %1586 = vmatpush1.bf16.msra.mxu0 0
        %1587 = vmatprep.subr.bf16.mxu0 0
        %1588 = vmatpush1.bf16.msra.mxu0 0
        %1589 = vmatprep.subr.bf16.mxu0 0
        %1590 = vmatpush1.bf16.msra.mxu0 0
        %1591 = vmatprep.subr.bf16.mxu0 0
        %1592 = vmatpush1.bf16.msra.mxu0 0
        %1593 = vmatprep.subr.bf16.mxu0 0
        %1594 = vmatpush1.bf16.msra.mxu0 0
        %1595 = vmatprep.subr.bf16.mxu0 0
        %1596 = vmatpush1.bf16.msra.mxu0 0
        %1597 = vmatprep.subr.bf16.mxu0 0
        %1598 = vmatpush1.bf16.msra.mxu0 0
        %1599 = vmatprep.subr.bf16.mxu0 0
        %1600 = vmatpush1.bf16.msra.mxu0 0
        %1601 = vmatprep.subr.bf16.mxu0 0
        %1602 = vmatpush1.bf16.msra.mxu0 0
        %1603 = vmatprep.subr.bf16.mxu0 0
        %1604 = vmatpush1.bf16.msra.mxu0 0
        %1605 = vmatprep.subr.bf16.mxu0 0
        %1606 = vmatpush1.bf16.msra.mxu0 0
        %1607 = vmatprep.subr.bf16.mxu0 0
        %1608 = vmatpush1.bf16.msra.mxu0 0
        %1609 = vmatprep.mubr.bf16.mxu0 0
        %1610 = vmatmul.mubr.bf16.gmra.mrb[0].mxu0 %v1571
        %v1611 = vpop.f32.mrb[0].mxu0
        %v1612 = vadd.f32 %v1567, %v1611
        %v1613 = vpop.f32.mrb[0].mxu0
        %v1614 = vpop.f32.mrb[0].mxu0
        %v1615 = vpop.f32.mrb[0].mxu0
        %1616 = vdwg.mxu0
        %v1618 = vsel %vm1569, %v1553, 0
        %v1621 = vsel %vm1573, %v1560, 0
        %1623 = vmatprep.subr.bf16.mxu0 0
        %1624 = vmatpush1.bf16.msra.mxu0 %v1621
        %1625 = vmatprep.subr.bf16.mxu0 0
        %1626 = vmatpush1.bf16.msra.mxu0 0
        %1627 = vmatprep.subr.bf16.mxu0 0
        %1628 = vmatpush1.bf16.msra.mxu0 0
        %1629 = vmatprep.subr.bf16.mxu0 0
        %1630 = vmatpush1.bf16.msra.mxu0 0
        %1631 = vmatprep.subr.bf16.mxu0 0
        %1632 = vmatpush1.bf16.msra.mxu0 0
        %1633 = vmatprep.subr.bf16.mxu0 0
        %1634 = vmatpush1.bf16.msra.mxu0 0
        %1635 = vmatprep.subr.bf16.mxu0 0
        %1636 = vmatpush1.bf16.msra.mxu0 0
        %1637 = vmatprep.subr.bf16.mxu0 0
        %1638 = vmatpush1.bf16.msra.mxu0 0
        %1639 = vmatprep.subr.bf16.mxu0 0
        %1640 = vmatpush1.bf16.msra.mxu0 0
        %1641 = vmatprep.subr.bf16.mxu0 0
        %1642 = vmatpush1.bf16.msra.mxu0 0
        %1643 = vmatprep.subr.bf16.mxu0 0
        %1644 = vmatpush1.bf16.msra.mxu0 0
        %1645 = vmatprep.subr.bf16.mxu0 0
        %1646 = vmatpush1.bf16.msra.mxu0 0
        %1647 = vmatprep.subr.bf16.mxu0 0
        %1648 = vmatpush1.bf16.msra.mxu0 0
        %1649 = vmatprep.subr.bf16.mxu0 0
        %1650 = vmatpush1.bf16.msra.mxu0 0
        %1651 = vmatprep.subr.bf16.mxu0 0
        %1652 = vmatpush1.bf16.msra.mxu0 0
        %1653 = vmatprep.subr.bf16.mxu0 0
        %1654 = vmatpush1.bf16.msra.mxu0 0
        %1655 = vmatprep.mubr.bf16.mxu0 0
        %1656 = vmatmul.mubr.bf16.gmra.mrb[0].mxu0 %v1618
        %v1657 = vpop.f32.mrb[0].mxu0
        %v1658 = vadd.f32 %v1567, %v1657
        %v1659 = vpop.f32.mrb[0].mxu0
        %v1660 = vpop.f32.mrb[0].mxu0
        %v1661 = vpop.f32.mrb[0].mxu0
        %1662 = vdwg.mxu0
        %v1664 = vsel %vm1569, %v1554, 0
        %v1667 = vsel %vm1573, %v1561, 0
        %1669 = vmatprep.subr.bf16.mxu0 0
        %1670 = vmatpush1.bf16.msra.mxu0 %v1667
        %1671 = vmatprep.subr.bf16.mxu0 0
        %1672 = vmatpush1.bf16.msra.mxu0 0
        %1673 = vmatprep.subr.bf16.mxu0 0
        %1674 = vmatpush1.bf16.msra.mxu0 0
        %1675 = vmatprep.subr.bf16.mxu0 0
        %1676 = vmatpush1.bf16.msra.mxu0 0
        %1677 = vmatprep.subr.bf16.mxu0 0
        %1678 = vmatpush1.bf16.msra.mxu0 0
        %1679 = vmatprep.subr.bf16.mxu0 0
        %1680 = vmatpush1.bf16.msra.mxu0 0
        %1681 = vmatprep.subr.bf16.mxu0 0
        %1682 = vmatpush1.bf16.msra.mxu0 0
        %1683 = vmatprep.subr.bf16.mxu0 0
        %1684 = vmatpush1.bf16.msra.mxu0 0
        %1685 = vmatprep.subr.bf16.mxu0 0
        %1686 = vmatpush1.bf16.msra.mxu0 0
        %1687 = vmatprep.subr.bf16.mxu0 0
        %1688 = vmatpush1.bf16.msra.mxu0 0
        %1689 = vmatprep.subr.bf16.mxu0 0
        %1690 = vmatpush1.bf16.msra.mxu0 0
        %1691 = vmatprep.subr.bf16.mxu0 0
        %1692 = vmatpush1.bf16.msra.mxu0 0
        %1693 = vmatprep.subr.bf16.mxu0 0
        %1694 = vmatpush1.bf16.msra.mxu0 0
        %1695 = vmatprep.subr.bf16.mxu0 0
        %1696 = vmatpush1.bf16.msra.mxu0 0
        %1697 = vmatprep.subr.bf16.mxu0 0
        %1698 = vmatpush1.bf16.msra.mxu0 0
        %1699 = vmatprep.subr.bf16.mxu0 0
        %1700 = vmatpush1.bf16.msra.mxu0 0
        %1701 = vmatprep.mubr.bf16.mxu0 0
        %1702 = vmatmul.mubr.bf16.gmra.mrb[0].mxu0 %v1664
        %v1703 = vpop.f32.mrb[0].mxu0
        %v1704 = vadd.f32 %v1567, %v1703
        %v1705 = vpop.f32.mrb[0].mxu0
        %v1706 = vpop.f32.mrb[0].mxu0
        %v1707 = vpop.f32.mrb[0].mxu0
        %1708 = vdwg.mxu0
        %v1710 = vsel %vm1569, %v1555, 0
        %v1713 = vsel %vm1573, %v1562, 0
        %1715 = vmatprep.subr.bf16.mxu0 0
        %1716 = vmatpush1.bf16.msra.mxu0 %v1713
        %1717 = vmatprep.subr.bf16.mxu0 0
        %1718 = vmatpush1.bf16.msra.mxu0 0
        %1719 = vmatprep.subr.bf16.mxu0 0
        %1720 = vmatpush1.bf16.msra.mxu0 0
        %1721 = vmatprep.subr.bf16.mxu0 0
        %1722 = vmatpush1.bf16.msra.mxu0 0
        %1723 = vmatprep.subr.bf16.mxu0 0
        %1724 = vmatpush1.bf16.msra.mxu0 0
        %1725 = vmatprep.subr.bf16.mxu0 0
        %1726 = vmatpush1.bf16.msra.mxu0 0
        %1727 = vmatprep.subr.bf16.mxu0 0
        %1728 = vmatpush1.bf16.msra.mxu0 0
        %1729 = vmatprep.subr.bf16.mxu0 0
        %1730 = vmatpush1.bf16.msra.mxu0 0
        %1731 = vmatprep.subr.bf16.mxu0 0
        %1732 = vmatpush1.bf16.msra.mxu0 0
        %1733 = vmatprep.subr.bf16.mxu0 0
        %1734 = vmatpush1.bf16.msra.mxu0 0
        %1735 = vmatprep.subr.bf16.mxu0 0
        %1736 = vmatpush1.bf16.msra.mxu0 0
        %1737 = vmatprep.subr.bf16.mxu0 0
        %1738 = vmatpush1.bf16.msra.mxu0 0
        %1739 = vmatprep.subr.bf16.mxu0 0
        %1740 = vmatpush1.bf16.msra.mxu0 0
        %1741 = vmatprep.subr.bf16.mxu0 0
        %1742 = vmatpush1.bf16.msra.mxu0 0
        %1743 = vmatprep.subr.bf16.mxu0 0
        %1744 = vmatpush1.bf16.msra.mxu0 0
        %1745 = vmatprep.subr.bf16.mxu0 0
        %1746 = vmatpush1.bf16.msra.mxu0 0
        %1747 = vmatprep.mubr.bf16.mxu0 0
        %1748 = vmatmul.mubr.bf16.gmra.mrb[0].mxu0 %v1710
        %v1749 = vpop.f32.mrb[0].mxu0
        %v1750 = vadd.f32 %v1567, %v1749
        %v1751 = vpop.f32.mrb[0].mxu0
        %v1752 = vpop.f32.mrb[0].mxu0
        %v1753 = vpop.f32.mrb[0].mxu0
        %1754 = vdwg.mxu0
        %v1755 = vsel %vm1569, %v1612, -inf
        %1756 = vmax.xlane.f32.xlu0 %v1755
        %v1757 = vpop.xlane.xlu0 %1756
        %v1758 = vsel %vm1569, %v1658, -inf
        %1759 = vmax.xlane.f32.xlu0 %v1758
        %v1760 = vpop.xlane.xlu0 %1759
        %v1761 = vsel %vm1569, %v1704, -inf
        %1762 = vmax.xlane.f32.xlu0 %v1761
        %v1763 = vpop.xlane.xlu0 %1762
        %v1764 = vsel %vm1569, %v1750, -inf
        %1765 = vmax.xlane.f32.xlu0 %v1764
        %v1766 = vpop.xlane.xlu0 %1765
        %v1767 = vsub.f32 %v1612, %v1757
        %v1768 = vsub.f32 %v1658, %v1760
        %v1769 = vsub.f32 %v1704, %v1763
        %v1770 = vsub.f32 %v1750, %v1766
        %v1771 = vmul.f32 %v1767, 1.442695
        %v1772 = vpow.pop %v1771
        %v1773 = vmul.f32 %v1768, 1.442695
        %v1774 = vpow.pop %v1773
        %v1775 = vmul.f32 %v1769, 1.442695
        %v1776 = vpow.pop %v1775
        %v1777 = vmul.f32 %v1770, 1.442695
        %v1778 = vpow.pop %v1777
        %v1779 = vsel %vm1569, %v1772, 0.0
        %1780 = vadd.xlane.f32.xlu0 %v1779
        %v1781 = vpop.xlane.xlu0 %1780
        %v1782 = vsel %vm1569, %v1774, 0.0
        %1783 = vadd.xlane.f32.xlu0 %v1782
        %v1784 = vpop.xlane.xlu0 %1783
        %v1785 = vsel %vm1569, %v1776, 0.0
        %1786 = vadd.xlane.f32.xlu0 %v1785
        %v1787 = vpop.xlane.xlu0 %1786
        %v1788 = vsel %vm1569, %v1778, 0.0
        %1789 = vadd.xlane.f32.xlu0 %v1788
        %v1790 = vpop.xlane.xlu0 %1789
        %v1791 = vpack.c.bf16 %v1772, %v1772
        %v1792 = vpack.c.bf16 %v1774, %v1774
        %v1793 = vpack.c.bf16 %v1776, %v1776
        %v1794 = vpack.c.bf16 %v1778, %v1778
        %v1795 = vld [vmem:[#allocation4] sm:$0xf]
        %v1796 = vld [vmem:[#allocation4 + $0x4] sm:$0xf]
        %v1797 = vld [vmem:[#allocation4 + $0x8] sm:$0xf]
        %v1798 = vld [vmem:[#allocation4 + $0xc] sm:$0xf]
        %v1800 = vsel %vm1569, %v1791, 0
        %v1803 = vsel %vm1573, %v1795, 0
        %1805 = vmatprep.subr.bf16.mxu0 0
        %1806 = vmatpush1.bf16.msra.mxu0 %v1803
        %1807 = vmatprep.subr.bf16.mxu0 0
        %1808 = vmatpush1.bf16.msra.mxu0 0
        %1809 = vmatprep.subr.bf16.mxu0 0
        %1810 = vmatpush1.bf16.msra.mxu0 0
        %1811 = vmatprep.subr.bf16.mxu0 0
        %1812 = vmatpush1.bf16.msra.mxu0 0
        %1813 = vmatprep.subr.bf16.mxu0 0
        %1814 = vmatpush1.bf16.msra.mxu0 0
        %1815 = vmatprep.subr.bf16.mxu0 0
        %1816 = vmatpush1.bf16.msra.mxu0 0
        %1817 = vmatprep.subr.bf16.mxu0 0
        %1818 = vmatpush1.bf16.msra.mxu0 0
        %1819 = vmatprep.subr.bf16.mxu0 0
        %1820 = vmatpush1.bf16.msra.mxu0 0
        %1821 = vmatprep.subr.bf16.mxu0 0
        %1822 = vmatpush1.bf16.msra.mxu0 0
        %1823 = vmatprep.subr.bf16.mxu0 0
        %1824 = vmatpush1.bf16.msra.mxu0 0
        %1825 = vmatprep.subr.bf16.mxu0 0
        %1826 = vmatpush1.bf16.msra.mxu0 0
        %1827 = vmatprep.subr.bf16.mxu0 0
        %1828 = vmatpush1.bf16.msra.mxu0 0
        %1829 = vmatprep.subr.bf16.mxu0 0
        %1830 = vmatpush1.bf16.msra.mxu0 0
        %1831 = vmatprep.subr.bf16.mxu0 0
        %1832 = vmatpush1.bf16.msra.mxu0 0
        %1833 = vmatprep.subr.bf16.mxu0 0
        %1834 = vmatpush1.bf16.msra.mxu0 0
        %1835 = vmatprep.subr.bf16.mxu0 0
        %1836 = vmatpush1.bf16.msra.mxu0 0
        %1837 = vmatprep.mubr.bf16.mxu0 0
        %1838 = vmatmul.mubr.bf16.gmra.mrb[0].mxu0 %v1800
        %v1839 = vpop.f32.mrb[0].mxu0
        %v1840 = vadd.f32 0.0, %v1839
        %v1841 = vpop.f32.mrb[0].mxu0
        %v1842 = vpop.f32.mrb[0].mxu0
        %v1843 = vpop.f32.mrb[0].mxu0
        %1844 = vdwg.mxu0
        %v1846 = vsel %vm1569, %v1792, 0
        %v1849 = vsel %vm1573, %v1796, 0
        %1851 = vmatprep.subr.bf16.mxu0 0
        %1852 = vmatpush1.bf16.msra.mxu0 %v1849
        %1853 = vmatprep.subr.bf16.mxu0 0
        %1854 = vmatpush1.bf16.msra.mxu0 0
        %1855 = vmatprep.subr.bf16.mxu0 0
        %1856 = vmatpush1.bf16.msra.mxu0 0
        %1857 = vmatprep.subr.bf16.mxu0 0
        %1858 = vmatpush1.bf16.msra.mxu0 0
        %1859 = vmatprep.subr.bf16.mxu0 0
        %1860 = vmatpush1.bf16.msra.mxu0 0
        %1861 = vmatprep.subr.bf16.mxu0 0
        %1862 = vmatpush1.bf16.msra.mxu0 0
        %1863 = vmatprep.subr.bf16.mxu0 0
        %1864 = vmatpush1.bf16.msra.mxu0 0
        %1865 = vmatprep.subr.bf16.mxu0 0
        %1866 = vmatpush1.bf16.msra.mxu0 0
        %1867 = vmatprep.subr.bf16.mxu0 0
        %1868 = vmatpush1.bf16.msra.mxu0 0
        %1869 = vmatprep.subr.bf16.mxu0 0
        %1870 = vmatpush1.bf16.msra.mxu0 0
        %1871 = vmatprep.subr.bf16.mxu0 0
        %1872 = vmatpush1.bf16.msra.mxu0 0
        %1873 = vmatprep.subr.bf16.mxu0 0
        %1874 = vmatpush1.bf16.msra.mxu0 0
        %1875 = vmatprep.subr.bf16.mxu0 0
        %1876 = vmatpush1.bf16.msra.mxu0 0
        %1877 = vmatprep.subr.bf16.mxu0 0
        %1878 = vmatpush1.bf16.msra.mxu0 0
        %1879 = vmatprep.subr.bf16.mxu0 0
        %1880 = vmatpush1.bf16.msra.mxu0 0
        %1881 = vmatprep.subr.bf16.mxu0 0
        %1882 = vmatpush1.bf16.msra.mxu0 0
        %1883 = vmatprep.mubr.bf16.mxu0 0
        %1884 = vmatmul.mubr.bf16.gmra.mrb[0].mxu0 %v1846
        %v1885 = vpop.f32.mrb[0].mxu0
        %v1886 = vadd.f32 0.0, %v1885
        %v1887 = vpop.f32.mrb[0].mxu0
        %v1888 = vpop.f32.mrb[0].mxu0
        %v1889 = vpop.f32.mrb[0].mxu0
        %1890 = vdwg.mxu0
        %v1892 = vsel %vm1569, %v1793, 0
        %v1895 = vsel %vm1573, %v1797, 0
        %1897 = vmatprep.subr.bf16.mxu0 0
        %1898 = vmatpush1.bf16.msra.mxu0 %v1895
        %1899 = vmatprep.subr.bf16.mxu0 0
        %1900 = vmatpush1.bf16.msra.mxu0 0
        %1901 = vmatprep.subr.bf16.mxu0 0
        %1902 = vmatpush1.bf16.msra.mxu0 0
        %1903 = vmatprep.subr.bf16.mxu0 0
        %1904 = vmatpush1.bf16.msra.mxu0 0
        %1905 = vmatprep.subr.bf16.mxu0 0
        %1906 = vmatpush1.bf16.msra.mxu0 0
        %1907 = vmatprep.subr.bf16.mxu0 0
        %1908 = vmatpush1.bf16.msra.mxu0 0
        %1909 = vmatprep.subr.bf16.mxu0 0
        %1910 = vmatpush1.bf16.msra.mxu0 0
        %1911 = vmatprep.subr.bf16.mxu0 0
        %1912 = vmatpush1.bf16.msra.mxu0 0
        %1913 = vmatprep.subr.bf16.mxu0 0
        %1914 = vmatpush1.bf16.msra.mxu0 0
        %1915 = vmatprep.subr.bf16.mxu0 0
        %1916 = vmatpush1.bf16.msra.mxu0 0
        %1917 = vmatprep.subr.bf16.mxu0 0
        %1918 = vmatpush1.bf16.msra.mxu0 0
        %1919 = vmatprep.subr.bf16.mxu0 0
        %1920 = vmatpush1.bf16.msra.mxu0 0
        %1921 = vmatprep.subr.bf16.mxu0 0
        %1922 = vmatpush1.bf16.msra.mxu0 0
        %1923 = vmatprep.subr.bf16.mxu0 0
        %1924 = vmatpush1.bf16.msra.mxu0 0
        %1925 = vmatprep.subr.bf16.mxu0 0
        %1926 = vmatpush1.bf16.msra.mxu0 0
        %1927 = vmatprep.subr.bf16.mxu0 0
        %1928 = vmatpush1.bf16.msra.mxu0 0
        %1929 = vmatprep.mubr.bf16.mxu0 0
        %1930 = vmatmul.mubr.bf16.gmra.mrb[0].mxu0 %v1892
        %v1931 = vpop.f32.mrb[0].mxu0
        %v1932 = vadd.f32 0.0, %v1931
        %v1933 = vpop.f32.mrb[0].mxu0
        %v1934 = vpop.f32.mrb[0].mxu0
        %v1935 = vpop.f32.mrb[0].mxu0
        %1936 = vdwg.mxu0
        %v1938 = vsel %vm1569, %v1794, 0
        %v1941 = vsel %vm1573, %v1798, 0
        %1943 = vmatprep.subr.bf16.mxu0 0
        %1944 = vmatpush1.bf16.msra.mxu0 %v1941
        %1945 = vmatprep.subr.bf16.mxu0 0
        %1946 = vmatpush1.bf16.msra.mxu0 0
        %1947 = vmatprep.subr.bf16.mxu0 0
        %1948 = vmatpush1.bf16.msra.mxu0 0
        %1949 = vmatprep.subr.bf16.mxu0 0
        %1950 = vmatpush1.bf16.msra.mxu0 0
        %1951 = vmatprep.subr.bf16.mxu0 0
        %1952 = vmatpush1.bf16.msra.mxu0 0
        %1953 = vmatprep.subr.bf16.mxu0 0
        %1954 = vmatpush1.bf16.msra.mxu0 0
        %1955 = vmatprep.subr.bf16.mxu0 0
        %1956 = vmatpush1.bf16.msra.mxu0 0
        %1957 = vmatprep.subr.bf16.mxu0 0
        %1958 = vmatpush1.bf16.msra.mxu0 0
        %1959 = vmatprep.subr.bf16.mxu0 0
        %1960 = vmatpush1.bf16.msra.mxu0 0
        %1961 = vmatprep.subr.bf16.mxu0 0
        %1962 = vmatpush1.bf16.msra.mxu0 0
        %1963 = vmatprep.subr.bf16.mxu0 0
        %1964 = vmatpush1.bf16.msra.mxu0 0
        %1965 = vmatprep.subr.bf16.mxu0 0
        %1966 = vmatpush1.bf16.msra.mxu0 0
        %1967 = vmatprep.subr.bf16.mxu0 0
        %1968 = vmatpush1.bf16.msra.mxu0 0
        %1969 = vmatprep.subr.bf16.mxu0 0
        %1970 = vmatpush1.bf16.msra.mxu0 0
        %1971 = vmatprep.subr.bf16.mxu0 0
        %1972 = vmatpush1.bf16.msra.mxu0 0
        %1973 = vmatprep.subr.bf16.mxu0 0
        %1974 = vmatpush1.bf16.msra.mxu0 0
        %1975 = vmatprep.mubr.bf16.mxu0 0
        %1976 = vmatmul.mubr.bf16.gmra.mrb[0].mxu0 %v1938
        %v1977 = vpop.f32.mrb[0].mxu0
        %v1978 = vadd.f32 0.0, %v1977
        %v1979 = vpop.f32.mrb[0].mxu0
        %v1980 = vpop.f32.mrb[0].mxu0
        %v1981 = vpop.f32.mrb[0].mxu0
        %1982 = vdwg.mxu0
        %v1983 = vrcp.pop %v1781
        %v1984 = vrcp.pop %v1784
        %v1985 = vrcp.pop %v1787
        %v1986 = vrcp.pop %v1790
        %v1987 = vmul.f32 %v1840, %v1983
        %v1988 = vmul.f32 %v1886, %v1984
        %v1989 = vmul.f32 %v1932, %v1985
        %v1990 = vmul.f32 %v1978, %v1986
        %v1991 = vcombine.low %v1987, %v1989
        %v1992 = vcombine.high %v1987, %v1989
        %v1994 = vunpack.c.l.s4 1983009808
        %v1995 = vunpack.c.0.s8 %v1994
        %v1996 = vlaneseq
        %v1997 = vshrl.u32 %v1996, 7
        %v1998 = vsub.s32 %v1995, %v1997
        %v1999 = vrot.slane %v1991, %v1998
        %v2001 = vunpack.c.l.s4 1983009808
        %v2002 = vunpack.c.0.s8 %v2001
        %v2003 = vlaneseq
        %v2004 = vshrl.u32 %v2003, 7
        %v2005 = vsub.s32 %v2002, %v2004
        %v2006 = vrot.slane %v1992, %v2005
        %v2007 = vcombine.low %v1988, %v1990
        %v2008 = vcombine.high %v1988, %v1990
        %v2010 = vunpack.c.l.s4 1983009808
        %v2011 = vunpack.c.0.s8 %v2010
        %v2012 = vlaneseq
        %v2013 = vshrl.u32 %v2012, 7
        %v2014 = vsub.s32 %v2011, %v2013
        %v2015 = vrot.slane %v2007, %v2014
        %v2017 = vunpack.c.l.s4 1983009808
        %v2018 = vunpack.c.0.s8 %v2017
        %v2019 = vlaneseq
        %v2020 = vshrl.u32 %v2019, 7
        %v2021 = vsub.s32 %v2018, %v2020
        %v2022 = vrot.slane %v2008, %v2021
        %v2023 = vcombine.low %v1999, %v2015
        %v2024 = vcombine.high %v1999, %v2015
        %v2026 = vunpack.c.l.s4 1934713408
        %v2027 = vunpack.c.0.s8 %v2026
        %v2028 = vlaneseq
        %v2029 = vshrl.u32 %v2028, 7
        %v2030 = vsub.s32 %v2027, %v2029
        %v2031 = vrot.slane %v2023, %v2030
        %v2033 = vunpack.c.l.s4 1934713408
        %v2034 = vunpack.c.0.s8 %v2033
        %v2035 = vlaneseq
        %v2036 = vshrl.u32 %v2035, 7
        %v2037 = vsub.s32 %v2034, %v2036
        %v2038 = vrot.slane %v2024, %v2037
        %v2039 = vcombine.low %v2006, %v2022
        %v2040 = vcombine.high %v2006, %v2022
        %v2042 = vunpack.c.l.s4 1934713408
        %v2043 = vunpack.c.0.s8 %v2042
        %v2044 = vlaneseq
        %v2045 = vshrl.u32 %v2044, 7
        %v2046 = vsub.s32 %v2043, %v2045
        %v2047 = vrot.slane %v2039, %v2046
        %v2049 = vunpack.c.l.s4 1934713408
        %v2050 = vunpack.c.0.s8 %v2049
        %v2051 = vlaneseq
        %v2052 = vshrl.u32 %v2051, 7
        %v2053 = vsub.s32 %v2050, %v2052
        %v2054 = vrot.slane %v2040, %v2053
        %v2055 = vcombine.high %v2031, 0.0
        %v2056 = vcombine.high %v2038, 0.0
        %v2057 = vcombine.high %v2047, 0.0
        %v2058 = vcombine.high %v2054, 0.0
        %v2059 = vcombine.low %v2031, %v2038
        %v2061 = vunpack.c.l.s4 1983009808
        %v2062 = vunpack.c.0.s8 %v2061
        %v2063 = vlaneseq
        %v2064 = vshrl.u32 %v2063, 7
        %v2065 = vsub.s32 %v2062, %v2064
        %v2066 = vrot.slane %v2059, %v2065
        %v2067 = vcombine.low %v2055, %v2056
        %v2069 = vunpack.c.l.s4 1983009808
        %v2070 = vunpack.c.0.s8 %v2069
        %v2071 = vlaneseq
        %v2072 = vshrl.u32 %v2071, 7
        %v2073 = vsub.s32 %v2070, %v2072
        %v2074 = vrot.slane %v2067, %v2073
        %v2075 = vcombine.low %v2047, %v2054
        %v2077 = vunpack.c.l.s4 1983009808
        %v2078 = vunpack.c.0.s8 %v2077
        %v2079 = vlaneseq
        %v2080 = vshrl.u32 %v2079, 7
        %v2081 = vsub.s32 %v2078, %v2080
        %v2082 = vrot.slane %v2075, %v2081
        %v2083 = vcombine.low %v2057, %v2058
        %v2085 = vunpack.c.l.s4 1983009808
        %v2086 = vunpack.c.0.s8 %v2085
        %v2087 = vlaneseq
        %v2088 = vshrl.u32 %v2087, 7
        %v2089 = vsub.s32 %v2086, %v2088
        %v2090 = vrot.slane %v2083, %v2089
        %v2091 = vcombine.low %v2066, %v2074
        %v2092 = vcombine.high %v2066, %v2074
        %v2094 = vunpack.c.l.s4 1934713408
        %v2095 = vunpack.c.0.s8 %v2094
        %v2096 = vlaneseq
        %v2097 = vshrl.u32 %v2096, 7
        %v2098 = vsub.s32 %v2095, %v2097
        %v2099 = vrot.slane %v2091, %v2098
        %v2101 = vunpack.c.l.s4 1934713408
        %v2102 = vunpack.c.0.s8 %v2101
        %v2103 = vlaneseq
        %v2104 = vshrl.u32 %v2103, 7
        %v2105 = vsub.s32 %v2102, %v2104
        %v2106 = vrot.slane %v2092, %v2105
        %v2107 = vcombine.low %v2082, %v2090
        %v2108 = vcombine.high %v2082, %v2090
        %v2110 = vunpack.c.l.s4 1934713408
        %v2111 = vunpack.c.0.s8 %v2110
        %v2112 = vlaneseq
        %v2113 = vshrl.u32 %v2112, 7
        %v2114 = vsub.s32 %v2111, %v2113
        %v2115 = vrot.slane %v2107, %v2114
        %v2117 = vunpack.c.l.s4 1934713408
        %v2118 = vunpack.c.0.s8 %v2117
        %v2119 = vlaneseq
        %v2120 = vshrl.u32 %v2119, 7
        %v2121 = vsub.s32 %v2118, %v2120
        %v2122 = vrot.slane %v2108, %v2121
        %v2123 = vcombine.low %v2099, %v2115
        %v2124 = vcombine.high %v2099, %v2115
        %v2125 = vcombine.low %v2106, %v2122
        %v2126 = vcombine.high %v2106, %v2122
        %2128 = vrot.lane.b32.xlu0 %v2124, 8
        %v2129 = vpop.permute.xlu0 %2128
        %2132 = vrot.lane.b32.xlu0 %v2125, 16
        %v2133 = vpop.permute.xlu0 %2132
        %2136 = vrot.lane.b32.xlu0 %v2126, 24
        %v2137 = vpop.permute.xlu0 %2136
        %v2139 = vsel %vm1569, %v2123, %v2129
        %vm2140 = vcmask 130048
        %v2141 = vsel %vm2140, %v2139, %v2133
        %vm2142 = vcmask 195584
        %v2143 = vsel %vm2142, %v2141, %v2137
        %v2144 = vpack.c.bf16 %v2143, %v2143
        %v2145 = vld [vmem:[#allocation19] sm:$0xf]
        %v2146 = vld [vmem:[#allocation19 + $0x4] sm:$0xf]
        %v2147 = vld [vmem:[#allocation19 + $0x8] sm:$0xf]
        %v2148 = vld [vmem:[#allocation19 + $0xc] sm:$0xf]
        %v2149 = vld [vmem:[#allocation20] sm:$0x1]
        %v2151 = vlaneseq
        %v2152 = vshrl.u32 %v2151, 7
        %v2153 = vsub.s32 0, %v2152
        %v2154 = vrot.slane %v2149, %v2153
        %v2160 = vunpack.c.l.b16 %v2145
        %v2161 = vunpack.c.l.b16 %v2146
        %v2162 = vunpack.c.l.b16 %v2147
        %v2163 = vunpack.c.l.b16 %v2148
        %v2164 = vpack.c.b16 %v2161, %v2160
        %v2165 = vpack.c.b16 %v2163, %v2162
        %v2169 = vsel %vm1362, %v2144, 0
        %2171 = vmatprep.subr.bf16.mxu0 0
        %2172 = vmatpush1.bf16.msra.mxu0 %v2164
        %2173 = vmatprep.subr.bf16.mxu0 0
        %2174 = vmatpush1.bf16.msra.mxu0 %v2165
        %2175 = vmatprep.subr.bf16.mxu0 0
        %2176 = vmatpush1.bf16.msra.mxu0 0
        %2177 = vmatprep.subr.bf16.mxu0 0
        %2178 = vmatpush1.bf16.msra.mxu0 0
        %2179 = vmatprep.subr.bf16.mxu0 0
        %2180 = vmatpush1.bf16.msra.mxu0 0
        %2181 = vmatprep.subr.bf16.mxu0 0
        %2182 = vmatpush1.bf16.msra.mxu0 0
        %2183 = vmatprep.subr.bf16.mxu0 0
        %2184 = vmatpush1.bf16.msra.mxu0 0
        %2185 = vmatprep.subr.bf16.mxu0 0
        %2186 = vmatpush1.bf16.msra.mxu0 0
        %2187 = vmatprep.subr.bf16.mxu0 0
        %2188 = vmatpush1.bf16.msra.mxu0 0
        %2189 = vmatprep.subr.bf16.mxu0 0
        %2190 = vmatpush1.bf16.msra.mxu0 0
        %2191 = vmatprep.subr.bf16.mxu0 0
        %2192 = vmatpush1.bf16.msra.mxu0 0
        %2193 = vmatprep.subr.bf16.mxu0 0
        %2194 = vmatpush1.bf16.msra.mxu0 0
        %2195 = vmatprep.subr.bf16.mxu0 0
        %2196 = vmatpush1.bf16.msra.mxu0 0
        %2197 = vmatprep.subr.bf16.mxu0 0
        %2198 = vmatpush1.bf16.msra.mxu0 0
        %2199 = vmatprep.subr.bf16.mxu0 0
        %2200 = vmatpush1.bf16.msra.mxu0 0
        %2201 = vmatprep.subr.bf16.mxu0 0
        %2202 = vmatpush1.bf16.msra.mxu0 0
        %2203 = vmatprep.mubr.bf16.mxu0 0
        %2204 = vmatmul.mubr.bf16.gmra.mrb[0].mxu0 %v2169
        %v2205 = vpop.f32.mrb[0].mxu0
        %v2206 = vadd.f32 %v2154, %v2205
        %v2207 = vpop.f32.mrb[0].mxu0
        %v2208 = vpop.f32.mrb[0].mxu0
        %v2209 = vpop.f32.mrb[0].mxu0
        %2210 = vdwg.mxu0
        %v2211 = vadd.f32 %v1333, %v2206
        %v2212 = vld [vmem:[#allocation31] sm:$0x1]
        %v2213 = vld [vmem:[#allocation32] sm:$0x1]
        %v2214 = vsel %vm1362, %v2211, 0.0
        %2215 = vadd.xlane.f32.xlu0 %v2214
        %v2216 = vpop.xlane.xlu0 %2215
        %v2217 = vrcp.pop 32.0
        %v2218 = vmul.f32 %v2216, %v2217
        %v2219 = vsub.f32 %v2211, %v2218
        %v2220 = vmul.f32 %v2219, %v2219
        %v2221 = vsel %vm1362, %v2220, 0.0
        %2222 = vadd.xlane.f32.xlu0 %v2221
        %v2223 = vpop.xlane.xlu0 %2222
        %v2224 = vmul.f32 %v2223, 0.032258064
        %v2225 = vrsqrt.pop %v2224
        %v2226 = vmul.f32 %v2224, %v2225
        %vm2227 = vcmp.eq.f32.partialorder %v2224, inf
        %v2228 = vsel %vm2227, %v2224, %v2226
        %vm2229 = vcmp.eq.f32.partialorder %v2224, 0.0
        %v2230 = vand.u32 %v2224, 2147483648
        %v2231 = vsel %vm2229, %v2230, %v2228
        %v2233 = vlaneseq
        %v2234 = vshrl.u32 %v2233, 7
        %v2235 = vsub.s32 0, %v2234
        %v2236 = vrot.slane %v2212, %v2235
        %v2238 = vmul.f32 %v2236, %v2219
        %v2239 = vadd.f32 %v2231, 1e-06
        %v2240 = vrcp.pop %v2239
        %v2241 = vmul.f32 %v2238, %v2240
        %v2243 = vlaneseq
        %v2244 = vshrl.u32 %v2243, 7
        %v2245 = vsub.s32 0, %v2244
        %v2246 = vrot.slane %v2213, %v2245
        %v2248 = vadd.f32 %v2241, %v2246
        %v2249 = vpack.c.bf16 %v2248, %v2248
        %v2250 = vld [vmem:[#allocation22] sm:$0xf]
        %v2251 = vld [vmem:[#allocation22 + $0x4] sm:$0xf]
        %v2252 = vld [vmem:[#allocation22 + $0x8] sm:$0xf]
        %v2253 = vld [vmem:[#allocation22 + $0xc] sm:$0xf]
        %v2254 = vld [vmem:[#allocation23] sm:$0x1]
        %v2256 = vlaneseq
        %v2257 = vshrl.u32 %v2256, 7
        %v2258 = vsub.s32 0, %v2257
        %v2259 = vrot.slane %v2254, %v2258
        %v2265 = vunpack.c.l.b16 %v2250
        %v2266 = vunpack.c.l.b16 %v2251
        %v2267 = vunpack.c.l.b16 %v2252
        %v2268 = vunpack.c.l.b16 %v2253
        %v2269 = vpack.c.b16 %v2266, %v2265
        %v2270 = vpack.c.b16 %v2268, %v2267
        %v2274 = vsel %vm1362, %v2249, 0
        %2276 = vmatprep.subr.bf16.mxu0 0
        %2277 = vmatpush1.bf16.msra.mxu0 %v2269
        %2278 = vmatprep.subr.bf16.mxu0 0
        %2279 = vmatpush1.bf16.msra.mxu0 %v2270
        %2280 = vmatprep.subr.bf16.mxu0 0
        %2281 = vmatpush1.bf16.msra.mxu0 0
        %2282 = vmatprep.subr.bf16.mxu0 0
        %2283 = vmatpush1.bf16.msra.mxu0 0
        %2284 = vmatprep.subr.bf16.mxu0 0
        %2285 = vmatpush1.bf16.msra.mxu0 0
        %2286 = vmatprep.subr.bf16.mxu0 0
        %2287 = vmatpush1.bf16.msra.mxu0 0
        %2288 = vmatprep.subr.bf16.mxu0 0
        %2289 = vmatpush1.bf16.msra.mxu0 0
        %2290 = vmatprep.subr.bf16.mxu0 0
        %2291 = vmatpush1.bf16.msra.mxu0 0
        %2292 = vmatprep.subr.bf16.mxu0 0
        %2293 = vmatpush1.bf16.msra.mxu0 0
        %2294 = vmatprep.subr.bf16.mxu0 0
        %2295 = vmatpush1.bf16.msra.mxu0 0
        %2296 = vmatprep.subr.bf16.mxu0 0
        %2297 = vmatpush1.bf16.msra.mxu0 0
        %2298 = vmatprep.subr.bf16.mxu0 0
        %2299 = vmatpush1.bf16.msra.mxu0 0
        %2300 = vmatprep.subr.bf16.mxu0 0
        %2301 = vmatpush1.bf16.msra.mxu0 0
        %2302 = vmatprep.subr.bf16.mxu0 0
        %2303 = vmatpush1.bf16.msra.mxu0 0
        %2304 = vmatprep.subr.bf16.mxu0 0
        %2305 = vmatpush1.bf16.msra.mxu0 0
        %2306 = vmatprep.subr.bf16.mxu0 0
        %2307 = vmatpush1.bf16.msra.mxu0 0
        %2308 = vmatprep.mubr.bf16.mxu0 0
        %2309 = vmatmul.mubr.bf16.gmra.mrb[0].mxu0 %v2274
        %v2310 = vpop.f32.mrb[0].mxu0
        %v2311 = vadd.f32 %v2259, %v2310
        %v2312 = vpop.f32.mrb[0].mxu0
        %v2313 = vpop.f32.mrb[0].mxu0
        %v2314 = vpop.f32.mrb[0].mxu0
        %2315 = vdwg.mxu0
        %v2316 = vmax.f32 %v2311, 0.0
        %v2317 = vpack.c.bf16 %v2316, %v2316
        %v2318 = vld [vmem:[#allocation25] sm:$0xf]
        %v2319 = vld [vmem:[#allocation25 + $0x4] sm:$0xf]
        %v2320 = vld [vmem:[#allocation25 + $0x8] sm:$0xf]
        %v2321 = vld [vmem:[#allocation25 + $0xc] sm:$0xf]
        %v2322 = vld [vmem:[#allocation25 + $0x10] sm:$0xf]
        %v2323 = vld [vmem:[#allocation25 + $0x14] sm:$0xf]
        %v2324 = vld [vmem:[#allocation25 + $0x18] sm:$0xf]
        %v2325 = vld [vmem:[#allocation25 + $0x1c] sm:$0xf]
        %v2326 = vld [vmem:[#allocation26] sm:$0x1]
        %v2328 = vlaneseq
        %v2329 = vshrl.u32 %v2328, 7
        %v2330 = vsub.s32 0, %v2329
        %v2331 = vrot.slane %v2326, %v2330
        %v2341 = vunpack.c.l.b16 %v2318
        %v2342 = vunpack.c.l.b16 %v2319
        %v2343 = vunpack.c.l.b16 %v2320
        %v2344 = vunpack.c.l.b16 %v2321
        %v2345 = vunpack.c.l.b16 %v2322
        %v2346 = vunpack.c.l.b16 %v2323
        %v2347 = vunpack.c.l.b16 %v2324
        %v2348 = vunpack.c.l.b16 %v2325
        %v2349 = vpack.c.b16 %v2342, %v2341
        %v2350 = vpack.c.b16 %v2344, %v2343
        %v2351 = vpack.c.b16 %v2346, %v2345
        %v2352 = vpack.c.b16 %v2348, %v2347
        %vm2357 = vcmask 523264
        %v2359 = vsel %vm2357, %v2317, 0
        %2361 = vmatprep.subr.bf16.mxu0 0
        %2362 = vmatpush1.bf16.msra.mxu0 %v2349
        %2363 = vmatprep.subr.bf16.mxu0 0
        %2364 = vmatpush1.bf16.msra.mxu0 %v2350
        %2365 = vmatprep.subr.bf16.mxu0 0
        %2366 = vmatpush1.bf16.msra.mxu0 %v2351
        %2367 = vmatprep.subr.bf16.mxu0 0
        %2368 = vmatpush1.bf16.msra.mxu0 %v2352
        %2369 = vmatprep.subr.bf16.mxu0 0
        %2370 = vmatpush1.bf16.msra.mxu0 0
        %2371 = vmatprep.subr.bf16.mxu0 0
        %2372 = vmatpush1.bf16.msra.mxu0 0
        %2373 = vmatprep.subr.bf16.mxu0 0
        %2374 = vmatpush1.bf16.msra.mxu0 0
        %2375 = vmatprep.subr.bf16.mxu0 0
        %2376 = vmatpush1.bf16.msra.mxu0 0
        %2377 = vmatprep.subr.bf16.mxu0 0
        %2378 = vmatpush1.bf16.msra.mxu0 0
        %2379 = vmatprep.subr.bf16.mxu0 0
        %2380 = vmatpush1.bf16.msra.mxu0 0
        %2381 = vmatprep.subr.bf16.mxu0 0
        %2382 = vmatpush1.bf16.msra.mxu0 0
        %2383 = vmatprep.subr.bf16.mxu0 0
        %2384 = vmatpush1.bf16.msra.mxu0 0
        %2385 = vmatprep.subr.bf16.mxu0 0
        %2386 = vmatpush1.bf16.msra.mxu0 0
        %2387 = vmatprep.subr.bf16.mxu0 0
        %2388 = vmatpush1.bf16.msra.mxu0 0
        %2389 = vmatprep.subr.bf16.mxu0 0
        %2390 = vmatpush1.bf16.msra.mxu0 0
        %2391 = vmatprep.subr.bf16.mxu0 0
        %2392 = vmatpush1.bf16.msra.mxu0 0
        %2393 = vmatprep.mubr.bf16.mxu0 0
        %2394 = vmatmul.mubr.bf16.gmra.mrb[0].mxu0 %v2359
        %v2395 = vpop.f32.mrb[0].mxu0
        %v2396 = vadd.f32 %v2331, %v2395
        %v2397 = vpop.f32.mrb[0].mxu0
        %v2398 = vpop.f32.mrb[0].mxu0
        %v2399 = vpop.f32.mrb[0].mxu0
        %2400 = vdwg.mxu0
        %v2401 = vadd.f32 %v2211, %v2396
        %2402 = vst.msk [vmem:[%s850] sm:$0xff] %vm1362, %v2401
        %s2403 = sand.u32 %s456, 1
        %s2404 = scalar_lea.sflag [#allocation7], %s2403
        %s2405 = sand.u32 %s456, 1
        %s2406 = smul.addr %s2405, 8
        %s2407 = scalar_lea.vmem [#allocation34], %s2406
        // Predicated region
        $region169: #{tpu_custom_call.1} parent=91 // pred_check
          %p2408 = pneg %p466
        $region170: #{tpu_custom_call.1} parent=91 // pred_check_branch
          %2410 = sbr.rel (%p2408) target = $region172
        $region171: #{tpu_custom_call.1} parent=91 // pred_region
          %s2412 = ssub.s32 128, 128
          %2413 = vsyncadd %s2404, %s2412
          %s2414 = sadd.s32 %s51, %s50
          %s2415 = smul.addr %s2414, 128
          %s2416 = scalar_lea.hbm %s18, %s2415
          %s2418 = sshll.u32 %s2407, 4
          %s2419 = int_to_ptr.vmem [resolvable:$true] %s2418
          %2421 = dma.vmem_to_hbm [thread:$0]  %s2419, 128, %s2416, %s2404
        $region172: #{tpu_custom_call.1} parent=91 // pred_fallthru
          _
      $region92: #{tpu_custom_call.1} parent=5 // pred_fallthru
        _
      %p2422 = scmp.le.s32.totalorder 2, %s41
      // Predicated region
      $region173: #{tpu_custom_call.1} parent=5 // pred_check
        %p2423 = pneg %p2422
      $region174: #{tpu_custom_call.1} parent=5 // pred_check_branch
        %2425 = sbr.rel (%p2423) target = $region176
      $region175: #{tpu_custom_call.1} parent=5 // pred_region
        %s2426 = ssub.s32 %s41, 2
        // Predicated region
        $region177: #{tpu_custom_call.1} parent=175 // pred_check
          %p2427 = pneg %p472
        $region178: #{tpu_custom_call.1} parent=175 // pred_check_branch
          %2429 = sbr.rel (%p2427) target = $region180
        $region179: #{tpu_custom_call.1} parent=175 // pred_region
          %s2430 = sand.u32 %s457, 1
          %s2431 = scalar_lea.sflag [#allocation7], %s2430
          %s2432 = sand.u32 %s457, 1
          %s2433 = smul.addr %s2432, 8
          %s2434 = scalar_lea.vmem [#allocation34], %s2433
          %2435 = dma.done %s2431, 128
        $region180: #{tpu_custom_call.1} parent=175 // pred_fallthru
          _
      $region176: #{tpu_custom_call.1} parent=5 // pred_fallthru
        _
    $region6: #{tpu_custom_call.1} parent=1 // loop_footer
      %s45 = sadd.s32 1, %s41
    $region7: #{tpu_custom_call.1} parent=1 // loop_footer_branch
      %40 = sbr.rel target = $region3
    $region8: #{tpu_custom_call.1} parent=1 // loop_exit
      _
    %2436 = vsyncpa [#allocation6], 1
    %s2437 = scalar_lea.sflag [#allocation6], 1
    %2438 = vsyncpa %s2437, 1
    %2439 = vsyncpa [#allocation9], 1
    %s2440 = scalar_lea.sflag [#allocation9], 1
    %2441 = vsyncpa %s2440, 1
    %2442 = vsyncpa [#allocation12], 1
    %2443 = vsyncpa [#allocation15], 1
    %2444 = vsyncpa [#allocation18], 1
    %2445 = vsyncpa [#allocation21], 1
    %2446 = vsyncpa [#allocation24], 1
    %2447 = vsyncpa [#allocation27], 1
    %2448 = vsyncpa [#allocation30], 1
    %2449 = vsyncpa [#allocation33], 1
    %2450 = vsyncpa [#allocation7], 1
    %s2451 = scalar_lea.sflag [#allocation7], 1
    %2452 = vsyncpa %s2451, 1

</llo_original>
